<compile_context>
chip_gen: v7x
topology: tpu7x:2x2x1
jax: 0.10.0
libtpu: 0.0.40
codegen_flags: <defaults>
</compile_context>

<pallas_src>
import math
import functools

import jax
import jax.numpy as jnp
from jax import lax
from jax.experimental import pallas as pl
from jax.experimental.pallas import tpu as pltpu


# ---------------------------------------------------------------------------
# Fused kernel: QKV projection + causal attention (all heads) + out projection
# One batch element per grid step.
# ---------------------------------------------------------------------------
def fused_csa_kernel(x_ref, wqkv_ref, bqkv_ref, wp_ref, bp_ref,
                     y_ref, att_ref, *, n_head):
    x = x_ref[0]                                           # (T, C)
    T, C = x.shape
    hd = C // n_head

    # Fused Q/K/V projection: one MXU pass over x.
    qkv = (jnp.dot(x, wqkv_ref[...], preferred_element_type=jnp.float32)
           + bqkv_ref[...])                                # (T, 3C) f32
    q = qkv[:, :C]            # already pre-scaled by 1/sqrt(hd) (folded in Wq)
    k = qkv[:, C:2 * C]
    v = qkv[:, 2 * C:]

    # Causal mask; diagonal is always unmasked so the softmax denom is > 0.
    row = lax.broadcasted_iota(jnp.int32, (T, T), 0)
    col = lax.broadcasted_iota(jnp.int32, (T, T), 1)
    causal = col <= row

    ys = []
    for h in range(n_head):                                # static unroll
        sl = slice(h * hd, (h + 1) * hd)
        qh, kh, vh = q[:, sl], k[:, sl], v[:, sl]

        # q @ k.T without materializing a transpose (contract the hd axis).
        s = lax.dot_general(qh, kh,
                            dimension_numbers=(((1,), (1,)), ((), ())),
                            preferred_element_type=jnp.float32)   # (T, T)
        s = jnp.where(causal, s, -jnp.inf)

        m = jnp.max(s, axis=-1, keepdims=True)
        e = jnp.exp(s - m)
        denom = jnp.sum(e, axis=-1, keepdims=True)
        p = e * pl.reciprocal(denom, approx=True)          # EUP vrcp, ~free

        att_ref[0, h] = p.astype(att_ref.dtype)
        ys.append(jnp.dot(p, vh, preferred_element_type=jnp.float32))

    # Merge heads (lane-dense (T, C)) and apply the output projection here,
    # avoiding the y_merged HBM round trip and a third pallas_call.
    y_full = jnp.concatenate(ys, axis=-1)                  # (T, C)
    y_ref[0] = (jnp.dot(y_full, wp_ref[...], preferred_element_type=jnp.float32)
                + bp_ref[...]).astype(y_ref.dtype)


# ---------------------------------------------------------------------------
# Wrapper
# ---------------------------------------------------------------------------
def causal_self_attention(x, params, n_head):
    """x: (B, T, C).  Returns (y, attn_save) like the torch module."""
    B, T, C = x.shape
    hd = C // n_head
    dt = x.dtype
    scale = 1.0 / math.sqrt(hd)

    # Fold the softmax scale into the query projection at trace time (free);
    # concatenate weights/biases so the kernel does a single (C, 3C) matmul.
    w_qkv = jnp.concatenate(
        [params["wq"] * scale, params["wk"], params["wv"]], axis=1)      # (C, 3C)
    b_qkv = jnp.concatenate(
        [params["bq"] * scale, params["bk"], params["bv"]]).reshape(1, 3 * C)
    wp = params["wp"]
    bp = params["bp"].reshape(1, C)

    kernel = functools.partial(fused_csa_kernel, n_head=n_head)

    y, attn_save = pl.pallas_call(
        kernel,
        out_shape=(jax.ShapeDtypeStruct((B, T, C), dt),
                   jax.ShapeDtypeStruct((B, n_head, T, T), dt)),
        grid=(B,),
        in_specs=[
            pl.BlockSpec((1, T, C), lambda b: (b, 0, 0)),            # x
            pl.BlockSpec((C, 3 * C), lambda b: (0, 0)),              # W_qkv
            pl.BlockSpec((1, 3 * C), lambda b: (0, 0)),              # b_qkv
            pl.BlockSpec((C, C), lambda b: (0, 0)),                  # W_proj
            pl.BlockSpec((1, C), lambda b: (0, 0)),                  # b_proj
        ],
        out_specs=(
            pl.BlockSpec((1, T, C), lambda b: (b, 0, 0)),            # y
            pl.BlockSpec((1, n_head, T, T), lambda b: (b, 0, 0, 0)), # attn_save
        ),
        compiler_params=pltpu.CompilerParams(
            dimension_semantics=("parallel",)),
    )(x, w_qkv, b_qkv, wp, bp)

    return y, attn_save


# ---------------------------------------------------------------------------
# Pure-JAX reference (mirrors the PyTorch forward) for verification
# ---------------------------------------------------------------------------
def reference(x, params, n_head):
    B, T, C = x.shape
    hd = C // n_head
    lin = lambda a, w, b: a @ w + b
    q = lin(x, params["wq"], params["bq"]).reshape(B, T, n_head, hd).transpose(0, 2, 1, 3)
    k = lin(x, params["wk"], params["bk"]).reshape(B, T, n_head, hd).transpose(0, 2, 1, 3)
    v = lin(x, params["wv"], params["bv"]).reshape(B, T, n_head, hd).transpose(0, 2, 1, 3)
    att = (q @ k.transpose(0, 1, 3, 2)) * (1.0 / math.sqrt(hd))
    mask = jnp.tril(jnp.ones((T, T), bool))
    att = jnp.where(mask[None, None], att, -jnp.inf)
    att = jax.nn.softmax(att, axis=-1)
    y = (att @ v).transpose(0, 2, 1, 3).reshape(B, T, C)
    y = lin(y, params["wp"], params["bp"])
    return y, att


if __name__ == "__main__":
    B, T, C, n_head = 2, 8, 32, 4        # small shapes consistent with the module

    key = jax.random.PRNGKey(0)
    keys = jax.random.split(key, 9)
    init = lambda k, shape: (jax.random.normal(k, shape, jnp.float32) * 0.05)

    params = {
        "wq": init(keys[0], (C, C)), "bq": init(keys[1], (C,)),
        "wk": init(keys[2], (C, C)), "bk": init(keys[3], (C,)),
        "wv": init(keys[4], (C, C)), "bv": init(keys[5], (C,)),
        "wp": init(keys[6], (C, C)), "bp": init(keys[7], (C,)),
    }
    x = jax.random.normal(keys[8], (B, T, C), jnp.float32)

    y, attn = causal_self_attention(x, params, n_head)
    y = jax.block_until_ready(y)
    attn = jax.block_until_ready(attn)

    y_ref, attn_ref = reference(x, params, n_head)
    # Tolerance loosened slightly for pl.reciprocal(approx=True).
    assert jnp.allclose(y, y_ref, atol=5e-3, rtol=5e-3)
    assert jnp.allclose(attn, attn_ref, atol=5e-3, rtol=5e-3)
    assert y.shape == (B, T, C) and attn.shape == (B, n_head, T, T)

    print("KERNEL_OK")
</pallas_src>

<mosaic_0001>
module attributes {stable_mosaic.version = 11 : i64} {
  func.func @fused_csa_kernel(%arg0: i32, %arg1: memref<1x8x32xf32, #tpu.memory_space<vmem>>, %arg2: memref<32x96xf32, #tpu.memory_space<vmem>>, %arg3: memref<1x96xf32, #tpu.memory_space<vmem>>, %arg4: memref<32x32xf32, #tpu.memory_space<vmem>>, %arg5: memref<1x32xf32, #tpu.memory_space<vmem>>, %arg6: memref<1x8x32xf32, #tpu.memory_space<vmem>>, %arg7: memref<1x4x8x8xf32, #tpu.memory_space<vmem>>) attributes {dimension_semantics = [#tpu.dimension_semantics<parallel>], iteration_bounds = array<i64: 2>, scalar_prefetch = 0 : i64, scratch_operands = 0 : i64, tpu.core_type = #tpu.core_type<tc>, window_params = [{transform_indices = @transform_0, window_bounds = array<i64: 1, 8, 32>}, {pipeline_mode = #tpu.pipeline_mode<synchronous>, transform_indices = @transform_1, window_bounds = array<i64: 32, 96>}, {pipeline_mode = #tpu.pipeline_mode<synchronous>, transform_indices = @transform_2, window_bounds = array<i64: 1, 96>}, {pipeline_mode = #tpu.pipeline_mode<synchronous>, transform_indices = @transform_3, window_bounds = array<i64: 32, 32>}, {pipeline_mode = #tpu.pipeline_mode<synchronous>, transform_indices = @transform_4, window_bounds = array<i64: 1, 32>}, {transform_indices = @transform_5, window_bounds = array<i64: 1, 8, 32>}, {transform_indices = @transform_6, window_bounds = array<i64: 1, 4, 8, 8>}]} {
    %c0 = arith.constant 0 : index
    %c0_0 = arith.constant 0 : index
    %c0_1 = arith.constant 0 : index
    %0 = vector.load %arg1[%c0, %c0_0, %c0_1] : memref<1x8x32xf32, #tpu.memory_space<vmem>>, vector<1x8x32xf32>
    %1 = vector.shape_cast %0 : vector<1x8x32xf32> to vector<8x32xf32>
    %c0_2 = arith.constant 0 : index
    %c0_3 = arith.constant 0 : index
    %2 = vector.load %arg2[%c0_2, %c0_3] : memref<32x96xf32, #tpu.memory_space<vmem>>, vector<32x96xf32>
    %cst = arith.constant dense<0.000000e+00> : vector<8x96xf32>
    %3 = tpu.matmul %1, %2, %cst {dimension_numbers = #tpu.dot_dimension_numbers<[1], [0], [0], [1], [0, 0, 1, 1], [], []>} : vector<8x32xf32>, vector<32x96xf32>, vector<8x96xf32> -> vector<8x96xf32>
    %c0_4 = arith.constant 0 : index
    %c0_5 = arith.constant 0 : index
    %4 = vector.load %arg3[%c0_4, %c0_5] : memref<1x96xf32, #tpu.memory_space<vmem>>, vector<1x96xf32>
    %5 = vector.broadcast %4 : vector<1x96xf32> to vector<8x96xf32>
    %6 = arith.addf %3, %5 : vector<8x96xf32>
    %7 = vector.extract_strided_slice %6 {offsets = [0, 0], sizes = [8, 32], strides = [1, 1]} : vector<8x96xf32> to vector<8x32xf32>
    %8 = vector.extract_strided_slice %6 {offsets = [0, 32], sizes = [8, 32], strides = [1, 1]} : vector<8x96xf32> to vector<8x32xf32>
    %9 = vector.extract_strided_slice %6 {offsets = [0, 64], sizes = [8, 32], strides = [1, 1]} : vector<8x96xf32> to vector<8x32xf32>
    %10 = tpu.iota {dimensions = array<i32: 0>} : vector<8x8xi32>
    %11 = tpu.iota {dimensions = array<i32: 1>} : vector<8x8xi32>
    %12 = arith.cmpi sle, %11, %10 : vector<8x8xi32>
    %13 = vector.extract_strided_slice %7 {offsets = [0, 0], sizes = [8, 8], strides = [1, 1]} : vector<8x32xf32> to vector<8x8xf32>
    %14 = vector.extract_strided_slice %8 {offsets = [0, 0], sizes = [8, 8], strides = [1, 1]} : vector<8x32xf32> to vector<8x8xf32>
    %15 = vector.extract_strided_slice %9 {offsets = [0, 0], sizes = [8, 8], strides = [1, 1]} : vector<8x32xf32> to vector<8x8xf32>
    %cst_6 = arith.constant dense<0.000000e+00> : vector<8x8xf32>
    %16 = tpu.matmul %13, %14, %cst_6 {dimension_numbers = #tpu.dot_dimension_numbers<[1], [1], [0], [0], [0, 0, 1, 0], [], []>} : vector<8x8xf32>, vector<8x8xf32>, vector<8x8xf32> -> vector<8x8xf32>
    %cst_7 = arith.constant 0xFF800000 : f32
    %17 = vector.broadcast %cst_7 : f32 to vector<8x8xf32>
    %18 = arith.select %12, %16, %17 : vector<8x8xi1>, vector<8x8xf32>
    %cst_8 = arith.constant dense<0xFF800000> : vector<8xf32>
    %19 = vector.multi_reduction <maximumf>, %18, %cst_8 [1] : vector<8x8xf32> to vector<8xf32>
    %20 = vector.shape_cast %19 : vector<8xf32> to vector<8x1xf32>
    %21 = vector.broadcast %20 : vector<8x1xf32> to vector<8x8xf32>
    %22 = arith.subf %18, %21 : vector<8x8xf32>
    %23 = math.exp %22 : vector<8x8xf32>
    %cst_9 = arith.constant dense<0.000000e+00> : vector<8xf32>
    %24 = vector.multi_reduction <add>, %23, %cst_9 [1] : vector<8x8xf32> to vector<8xf32>
    %25 = vector.shape_cast %24 : vector<8xf32> to vector<8x1xf32>
    %26 = tpu.reciprocal %25 {approx = true} : vector<8x1xf32> -> vector<8x1xf32>
    %27 = vector.broadcast %26 : vector<8x1xf32> to vector<8x8xf32>
    %28 = arith.mulf %23, %27 : vector<8x8xf32>
    %c0_10 = arith.constant 0 : index
    %c0_11 = arith.constant 0 : index
    %c0_12 = arith.constant 0 : index
    %c0_13 = arith.constant 0 : index
    %29 = vector.load %arg7[%c0_10, %c0_11, %c0_12, %c0_13] : memref<1x4x8x8xf32, #tpu.memory_space<vmem>>, vector<1x1x8x8xf32>
    %30 = vector.shape_cast %29 : vector<1x1x8x8xf32> to vector<8x8xf32>
    %31 = vector.shape_cast %28 : vector<8x8xf32> to vector<1x1x8x8xf32>
    tpu.vector_store %arg7[%c0_10, %c0_11, %c0_12, %c0_13], %31 {strides = array<i32>} : memref<1x4x8x8xf32, #tpu.memory_space<vmem>>, vector<1x1x8x8xf32>,
    %cst_14 = arith.constant dense<0.000000e+00> : vector<8x8xf32>
    %32 = tpu.matmul %28, %15, %cst_14 {dimension_numbers = #tpu.dot_dimension_numbers<[1], [0], [0], [1], [0, 0, 1, 1], [], []>} : vector<8x8xf32>, vector<8x8xf32>, vector<8x8xf32> -> vector<8x8xf32>
    %33 = vector.extract_strided_slice %7 {offsets = [0, 8], sizes = [8, 8], strides = [1, 1]} : vector<8x32xf32> to vector<8x8xf32>
    %34 = vector.extract_strided_slice %8 {offsets = [0, 8], sizes = [8, 8], strides = [1, 1]} : vector<8x32xf32> to vector<8x8xf32>
    %35 = vector.extract_strided_slice %9 {offsets = [0, 8], sizes = [8, 8], strides = [1, 1]} : vector<8x32xf32> to vector<8x8xf32>
    %cst_15 = arith.constant dense<0.000000e+00> : vector<8x8xf32>
    %36 = tpu.matmul %33, %34, %cst_15 {dimension_numbers = #tpu.dot_dimension_numbers<[1], [1], [0], [0], [0, 0, 1, 0], [], []>} : vector<8x8xf32>, vector<8x8xf32>, vector<8x8xf32> -> vector<8x8xf32>
    %cst_16 = arith.constant 0xFF800000 : f32
    %37 = vector.broadcast %cst_16 : f32 to vector<8x8xf32>
    %38 = arith.select %12, %36, %37 : vector<8x8xi1>, vector<8x8xf32>
    %cst_17 = arith.constant dense<0xFF800000> : vector<8xf32>
    %39 = vector.multi_reduction <maximumf>, %38, %cst_17 [1] : vector<8x8xf32> to vector<8xf32>
    %40 = vector.shape_cast %39 : vector<8xf32> to vector<8x1xf32>
    %41 = vector.broadcast %40 : vector<8x1xf32> to vector<8x8xf32>
    %42 = arith.subf %38, %41 : vector<8x8xf32>
    %43 = math.exp %42 : vector<8x8xf32>
    %cst_18 = arith.constant dense<0.000000e+00> : vector<8xf32>
    %44 = vector.multi_reduction <add>, %43, %cst_18 [1] : vector<8x8xf32> to vector<8xf32>
    %45 = vector.shape_cast %44 : vector<8xf32> to vector<8x1xf32>
    %46 = tpu.reciprocal %45 {approx = true} : vector<8x1xf32> -> vector<8x1xf32>
    %47 = vector.broadcast %46 : vector<8x1xf32> to vector<8x8xf32>
    %48 = arith.mulf %43, %47 : vector<8x8xf32>
    %c0_19 = arith.constant 0 : index
    %c1 = arith.constant 1 : index
    %c0_20 = arith.constant 0 : index
    %c0_21 = arith.constant 0 : index
    %49 = vector.load %arg7[%c0_19, %c1, %c0_20, %c0_21] : memref<1x4x8x8xf32, #tpu.memory_space<vmem>>, vector<1x1x8x8xf32>
    %50 = vector.shape_cast %49 : vector<1x1x8x8xf32> to vector<8x8xf32>
    %51 = vector.shape_cast %48 : vector<8x8xf32> to vector<1x1x8x8xf32>
    tpu.vector_store %arg7[%c0_19, %c1, %c0_20, %c0_21], %51 {strides = array<i32>} : memref<1x4x8x8xf32, #tpu.memory_space<vmem>>, vector<1x1x8x8xf32>,
    %cst_22 = arith.constant dense<0.000000e+00> : vector<8x8xf32>
    %52 = tpu.matmul %48, %35, %cst_22 {dimension_numbers = #tpu.dot_dimension_numbers<[1], [0], [0], [1], [0, 0, 1, 1], [], []>} : vector<8x8xf32>, vector<8x8xf32>, vector<8x8xf32> -> vector<8x8xf32>
    %53 = vector.extract_strided_slice %7 {offsets = [0, 16], sizes = [8, 8], strides = [1, 1]} : vector<8x32xf32> to vector<8x8xf32>
    %54 = vector.extract_strided_slice %8 {offsets = [0, 16], sizes = [8, 8], strides = [1, 1]} : vector<8x32xf32> to vector<8x8xf32>
    %55 = vector.extract_strided_slice %9 {offsets = [0, 16], sizes = [8, 8], strides = [1, 1]} : vector<8x32xf32> to vector<8x8xf32>
    %cst_23 = arith.constant dense<0.000000e+00> : vector<8x8xf32>
    %56 = tpu.matmul %53, %54, %cst_23 {dimension_numbers = #tpu.dot_dimension_numbers<[1], [1], [0], [0], [0, 0, 1, 0], [], []>} : vector<8x8xf32>, vector<8x8xf32>, vector<8x8xf32> -> vector<8x8xf32>
    %cst_24 = arith.constant 0xFF800000 : f32
    %57 = vector.broadcast %cst_24 : f32 to vector<8x8xf32>
    %58 = arith.select %12, %56, %57 : vector<8x8xi1>, vector<8x8xf32>
    %cst_25 = arith.constant dense<0xFF800000> : vector<8xf32>
    %59 = vector.multi_reduction <maximumf>, %58, %cst_25 [1] : vector<8x8xf32> to vector<8xf32>
    %60 = vector.shape_cast %59 : vector<8xf32> to vector<8x1xf32>
    %61 = vector.broadcast %60 : vector<8x1xf32> to vector<8x8xf32>
    %62 = arith.subf %58, %61 : vector<8x8xf32>
    %63 = math.exp %62 : vector<8x8xf32>
    %cst_26 = arith.constant dense<0.000000e+00> : vector<8xf32>
    %64 = vector.multi_reduction <add>, %63, %cst_26 [1] : vector<8x8xf32> to vector<8xf32>
    %65 = vector.shape_cast %64 : vector<8xf32> to vector<8x1xf32>
    %66 = tpu.reciprocal %65 {approx = true} : vector<8x1xf32> -> vector<8x1xf32>
    %67 = vector.broadcast %66 : vector<8x1xf32> to vector<8x8xf32>
    %68 = arith.mulf %63, %67 : vector<8x8xf32>
    %c0_27 = arith.constant 0 : index
    %c2 = arith.constant 2 : index
    %c0_28 = arith.constant 0 : index
    %c0_29 = arith.constant 0 : index
    %69 = vector.load %arg7[%c0_27, %c2, %c0_28, %c0_29] : memref<1x4x8x8xf32, #tpu.memory_space<vmem>>, vector<1x1x8x8xf32>
    %70 = vector.shape_cast %69 : vector<1x1x8x8xf32> to vector<8x8xf32>
    %71 = vector.shape_cast %68 : vector<8x8xf32> to vector<1x1x8x8xf32>
    tpu.vector_store %arg7[%c0_27, %c2, %c0_28, %c0_29], %71 {strides = array<i32>} : memref<1x4x8x8xf32, #tpu.memory_space<vmem>>, vector<1x1x8x8xf32>,
    %cst_30 = arith.constant dense<0.000000e+00> : vector<8x8xf32>
    %72 = tpu.matmul %68, %55, %cst_30 {dimension_numbers = #tpu.dot_dimension_numbers<[1], [0], [0], [1], [0, 0, 1, 1], [], []>} : vector<8x8xf32>, vector<8x8xf32>, vector<8x8xf32> -> vector<8x8xf32>
    %73 = vector.extract_strided_slice %7 {offsets = [0, 24], sizes = [8, 8], strides = [1, 1]} : vector<8x32xf32> to vector<8x8xf32>
    %74 = vector.extract_strided_slice %8 {offsets = [0, 24], sizes = [8, 8], strides = [1, 1]} : vector<8x32xf32> to vector<8x8xf32>
    %75 = vector.extract_strided_slice %9 {offsets = [0, 24], sizes = [8, 8], strides = [1, 1]} : vector<8x32xf32> to vector<8x8xf32>
    %cst_31 = arith.constant dense<0.000000e+00> : vector<8x8xf32>
    %76 = tpu.matmul %73, %74, %cst_31 {dimension_numbers = #tpu.dot_dimension_numbers<[1], [1], [0], [0], [0, 0, 1, 0], [], []>} : vector<8x8xf32>, vector<8x8xf32>, vector<8x8xf32> -> vector<8x8xf32>
    %cst_32 = arith.constant 0xFF800000 : f32
    %77 = vector.broadcast %cst_32 : f32 to vector<8x8xf32>
    %78 = arith.select %12, %76, %77 : vector<8x8xi1>, vector<8x8xf32>
    %cst_33 = arith.constant dense<0xFF800000> : vector<8xf32>
    %79 = vector.multi_reduction <maximumf>, %78, %cst_33 [1] : vector<8x8xf32> to vector<8xf32>
    %80 = vector.shape_cast %79 : vector<8xf32> to vector<8x1xf32>
    %81 = vector.broadcast %80 : vector<8x1xf32> to vector<8x8xf32>
    %82 = arith.subf %78, %81 : vector<8x8xf32>
    %83 = math.exp %82 : vector<8x8xf32>
    %cst_34 = arith.constant dense<0.000000e+00> : vector<8xf32>
    %84 = vector.multi_reduction <add>, %83, %cst_34 [1] : vector<8x8xf32> to vector<8xf32>
    %85 = vector.shape_cast %84 : vector<8xf32> to vector<8x1xf32>
    %86 = tpu.reciprocal %85 {approx = true} : vector<8x1xf32> -> vector<8x1xf32>
    %87 = vector.broadcast %86 : vector<8x1xf32> to vector<8x8xf32>
    %88 = arith.mulf %83, %87 : vector<8x8xf32>
    %c0_35 = arith.constant 0 : index
    %c3 = arith.constant 3 : index
    %c0_36 = arith.constant 0 : index
    %c0_37 = arith.constant 0 : index
    %89 = vector.load %arg7[%c0_35, %c3, %c0_36, %c0_37] : memref<1x4x8x8xf32, #tpu.memory_space<vmem>>, vector<1x1x8x8xf32>
    %90 = vector.shape_cast %89 : vector<1x1x8x8xf32> to vector<8x8xf32>
    %91 = vector.shape_cast %88 : vector<8x8xf32> to vector<1x1x8x8xf32>
    tpu.vector_store %arg7[%c0_35, %c3, %c0_36, %c0_37], %91 {strides = array<i32>} : memref<1x4x8x8xf32, #tpu.memory_space<vmem>>, vector<1x1x8x8xf32>,
    %cst_38 = arith.constant dense<0.000000e+00> : vector<8x8xf32>
    %92 = tpu.matmul %88, %75, %cst_38 {dimension_numbers = #tpu.dot_dimension_numbers<[1], [0], [0], [1], [0, 0, 1, 1], [], []>} : vector<8x8xf32>, vector<8x8xf32>, vector<8x8xf32> -> vector<8x8xf32>
    %93 = tpu.concatenate %32, %52, %72, %92 in 1 : vector<8x8xf32>, vector<8x8xf32>, vector<8x8xf32>, vector<8x8xf32> -> vector<8x32xf32>
    %c0_39 = arith.constant 0 : index
    %c0_40 = arith.constant 0 : index
    %94 = vector.load %arg4[%c0_39, %c0_40] : memref<32x32xf32, #tpu.memory_space<vmem>>, vector<32x32xf32>
    %cst_41 = arith.constant dense<0.000000e+00> : vector<8x32xf32>
    %95 = tpu.matmul %93, %94, %cst_41 {dimension_numbers = #tpu.dot_dimension_numbers<[1], [0], [0], [1], [0, 0, 1, 1], [], []>} : vector<8x32xf32>, vector<32x32xf32>, vector<8x32xf32> -> vector<8x32xf32>
    %c0_42 = arith.constant 0 : index
    %c0_43 = arith.constant 0 : index
    %96 = vector.load %arg5[%c0_42, %c0_43] : memref<1x32xf32, #tpu.memory_space<vmem>>, vector<1x32xf32>
    %97 = vector.broadcast %96 : vector<1x32xf32> to vector<8x32xf32>
    %98 = arith.addf %95, %97 : vector<8x32xf32>
    %c0_44 = arith.constant 0 : index
    %c0_45 = arith.constant 0 : index
    %c0_46 = arith.constant 0 : index
    %99 = vector.load %arg6[%c0_44, %c0_45, %c0_46] : memref<1x8x32xf32, #tpu.memory_space<vmem>>, vector<1x8x32xf32>
    %100 = vector.shape_cast %99 : vector<1x8x32xf32> to vector<8x32xf32>
    %101 = vector.shape_cast %98 : vector<8x32xf32> to vector<1x8x32xf32>
    tpu.vector_store %arg6[%c0_44, %c0_45, %c0_46], %101 {strides = array<i32>} : memref<1x8x32xf32, #tpu.memory_space<vmem>>, vector<1x8x32xf32>,
    return
  }
  func.func @transform_0(%arg0: i32) -> (i32, i32, i32) {
    %c0_i32 = arith.constant 0 : i32
    %c0_i32_0 = arith.constant 0 : i32
    %c0_i32_1 = arith.constant 0 : i32
    return %arg0, %c0_i32, %c0_i32_0 : i32, i32, i32
  }
  func.func @transform_1(%arg0: i32) -> (i32, i32) {
    %c0_i32 = arith.constant 0 : i32
    %c0_i32_0 = arith.constant 0 : i32
    %c0_i32_1 = arith.constant 0 : i32
    return %c0_i32, %c0_i32_0 : i32, i32
  }
  func.func @transform_2(%arg0: i32) -> (i32, i32) {
    %c0_i32 = arith.constant 0 : i32
    %c0_i32_0 = arith.constant 0 : i32
    %c0_i32_1 = arith.constant 0 : i32
    return %c0_i32, %c0_i32_0 : i32, i32
  }
  func.func @transform_3(%arg0: i32) -> (i32, i32) {
    %c0_i32 = arith.constant 0 : i32
    %c0_i32_0 = arith.constant 0 : i32
    %c0_i32_1 = arith.constant 0 : i32
    return %c0_i32, %c0_i32_0 : i32, i32
  }
  func.func @transform_4(%arg0: i32) -> (i32, i32) {
    %c0_i32 = arith.constant 0 : i32
    %c0_i32_0 = arith.constant 0 : i32
    %c0_i32_1 = arith.constant 0 : i32
    return %c0_i32, %c0_i32_0 : i32, i32
  }
  func.func @transform_5(%arg0: i32) -> (i32, i32, i32) {
    %c0_i32 = arith.constant 0 : i32
    %c0_i32_0 = arith.constant 0 : i32
    %c0_i32_1 = arith.constant 0 : i32
    return %arg0, %c0_i32, %c0_i32_0 : i32, i32, i32
  }
  func.func @transform_6(%arg0: i32) -> (i32, i32, i32, i32) {
    %c0_i32 = arith.constant 0 : i32
    %c0_i32_0 = arith.constant 0 : i32
    %c0_i32_1 = arith.constant 0 : i32
    %c0_i32_2 = arith.constant 0 : i32
    return %arg0, %c0_i32, %c0_i32_0, %c0_i32_1 : i32, i32, i32, i32
  }
}

</mosaic_0001>

<llo_original>
// kernel: tpu_custom_call.1
$region0: #{tpu_custom_call.1}
  #allocation0 [shape = 'u32[]', space=smem, size = 0x4, offset = 0x4, fixed_abs, tag = 'smem constant byte address 0x4 - core index']
  #allocation1 [shape = 'u32[144,128]{1,0:T(1,128)}', space=vmem, size = 0x12000, scoped, tag = 'internal scratch']
  %s0 = inlined_call_operand.hbm [shape: f32[2,8,32], index: 0, kind: input, shape index: {}]
  %s1 = inlined_call_operand.hbm [shape: f32[32,96], index: 1, kind: input, shape index: {}]
  %s2 = inlined_call_operand.vmem [shape: f32[1,96], index: 2, kind: input, shape index: {}]
  %s3 = inlined_call_operand.hbm [shape: f32[32,32], index: 3, kind: input, shape index: {}]
  %s4 = inlined_call_operand.vmem [shape: f32[1,32], index: 4, kind: input, shape index: {}]
  %s5 = inlined_call_operand.hbm [shape: f32[2,8,32], index: 5, kind: output, shape index: {0}]
  %s6 = inlined_call_operand.hbm [shape: f32[2,4,8,8], index: 6, kind: output, shape index: {1}]
  %7 = xla_tuple %s5, %s6
  %s8 = sld [smem:[#allocation0]]
  $region73: #{tpu_custom_call.1} parent=0
    _
  %s10 = ssub.s32 1, %s8
  %s11 = scalar_select 0, %s10, %s8
  $region1: #{tpu_custom_call.1} parent=0
    #allocation2 [shape = 'u8[8192]{0}', space=vmem, size = 0x2000, scoped, tag = 'input window, operand 0']
    #allocation3 [shape = 's32[2]{0}', space=sflag, size = 0x8, scoped, tag = 'scoped memory for tpu_custom_call.1']
    #allocation4 [shape = 's32[2]{0}', space=sflag, size = 0x8, scoped, tag = 'scoped memory for tpu_custom_call.1']
    #allocation5 [shape = 'u8[16384]{0}', space=vmem, size = 0x4000, scoped, tag = 'input window, operand 1, single buffered']
    #allocation6 [shape = 's32[1]{0}', space=sflag, size = 0x4, scoped, tag = 'scoped memory for tpu_custom_call.1']
    #allocation7 [shape = 'u8[16384]{0}', space=vmem, size = 0x4000, scoped, tag = 'input window, operand 3, single buffered']
    #allocation8 [shape = 'u8[8192]{0}', space=vmem, size = 0x2000, scoped, tag = 'output window, operand 0']
    #allocation9 [shape = 'u8[32768]{0}', space=vmem, size = 0x8000, scoped, tag = 'output window, operand 1']
    #allocation10 [shape = 's32[2]{0}', space=sflag, size = 0x8, scoped, tag = 'scoped memory for tpu_custom_call.1']
    %12 = vsyncpa [#allocation3], 0
    %s13 = scalar_lea.sflag [#allocation3], 1
    %14 = vsyncpa %s13, 0
    %15 = vsyncpa [#allocation6], 0
    %16 = vsyncpa [#allocation4], 0
    %s17 = scalar_lea.sflag [#allocation4], 1
    %18 = vsyncpa %s17, 0
    %19 = vsyncpa [#allocation10], 0
    %s20 = scalar_lea.sflag [#allocation10], 1
    %21 = vsyncpa %s20, 0
    loop: start=0, step=1, limit=4
    $region2: #{tpu_custom_call.1} parent=1 // loop_pre_header
      _
    $region3: #{tpu_custom_call.1} parent=1 // loop_header
      %s23 = sphi 0, %s27
      %p24 = scmp.ge.s32.totalorder %s23, 4
      %s33 = sphi 0, %s35
      %s36 = sphi 0, %s33
      %s37 = sphi 0, %s36
      %s53 = sphi 0, %s37
      %s57 = sphi 0, %s57
      %s59 = sphi 0, %s57
      %s60 = sphi 0, %s59
      %s74 = sphi 0, %s60
      %s78 = sphi 0, %s78
      %s80 = sphi 0, %s78
      %s81 = sphi 0, %s80
      %s95 = sphi 0, %s81
      %s99 = sphi 0, %s99
      %s101 = sphi 0, %s99
      %s102 = sphi 0, %s101
      %s116 = sphi 0, %s102
      %s120 = sphi 0, %s120
      %s122 = sphi 0, %s120
      %s123 = sphi 0, %s122
      %s137 = sphi 0, %s123
      %s143 = sphi 0, %s145
      %s146 = sphi 0, %s143
      %s147 = sphi 0, %s146
      %s163 = sphi 0, %s147
      %s169 = sphi 0, %s171
      %s172 = sphi 0, %s169
      %s173 = sphi 0, %s172
      %s189 = sphi 0, %s173
    $region4: #{tpu_custom_call.1} parent=1 // loop_header_branch
      %26 = sbr.rel (%p24) target = $region8
    $region5: #{tpu_custom_call.1} parent=1 // loop_body
      %s28 = ssub.s32 %s23, 1
      %s29 = ssub.s32 %s23, 2
      %s30 = sadd.s32 %s23, 1
      %s31 = ssub.s32 %s23, %s30
      %p32 = scmp.eq.s32.totalorder %s31, 0
      %s34 = sadd.s32 %s33, 1
      %s35 = scalar_select %p32, %s33, %s34
      %p38 = pneg %p32
      %p39 = scmp.eq.s32.totalorder %s23, 1
      %p40 = por %p38, %p39
      %p41 = scmp.ne.s32.totalorder %s33, %s36
      %p42 = scmp.eq.s32.totalorder %s23, 0
      %p43 = por %p41, %p42
      %p44 = scmp.ne.s32.totalorder %s33, %s36
      %p45 = scmp.eq.s32.totalorder %s28, 1
      %p46 = por %p44, %p45
      %p47 = scmp.ne.s32.totalorder %s36, %s37
      %p48 = scmp.eq.s32.totalorder %s28, 0
      %p49 = por %p47, %p48
      %p50 = scmp.ne.s32.totalorder %s36, %s37
      %p51 = scmp.eq.s32.totalorder %s29, 1
      %p52 = por %p50, %p51
      %p54 = scmp.ne.s32.totalorder %s37, %s53
      %p55 = scmp.eq.s32.totalorder %s29, 0
      %p56 = por %p54, %p55
      %s58 = sadd.s32 %s57, 1
      %p61 = scmp.eq.s32.totalorder %s23, 1
      %p62 = scmp.ne.s32.totalorder %s57, %s59
      %p63 = scmp.eq.s32.totalorder %s23, 0
      %p64 = por %p62, %p63
      %p65 = scmp.ne.s32.totalorder %s57, %s59
      %p66 = scmp.eq.s32.totalorder %s28, 1
      %p67 = por %p65, %p66
      %p68 = scmp.ne.s32.totalorder %s59, %s60
      %p69 = scmp.eq.s32.totalorder %s28, 0
      %p70 = por %p68, %p69
      %p71 = scmp.ne.s32.totalorder %s59, %s60
      %p72 = scmp.eq.s32.totalorder %s29, 1
      %p73 = por %p71, %p72
      %p75 = scmp.ne.s32.totalorder %s60, %s74
      %p76 = scmp.eq.s32.totalorder %s29, 0
      %p77 = por %p75, %p76
      %s79 = sadd.s32 %s78, 1
      %p82 = scmp.eq.s32.totalorder %s23, 1
      %p83 = scmp.ne.s32.totalorder %s78, %s80
      %p84 = scmp.eq.s32.totalorder %s23, 0
      %p85 = por %p83, %p84
      %p86 = scmp.ne.s32.totalorder %s78, %s80
      %p87 = scmp.eq.s32.totalorder %s28, 1
      %p88 = por %p86, %p87
      %p89 = scmp.ne.s32.totalorder %s80, %s81
      %p90 = scmp.eq.s32.totalorder %s28, 0
      %p91 = por %p89, %p90
      %p92 = scmp.ne.s32.totalorder %s80, %s81
      %p93 = scmp.eq.s32.totalorder %s29, 1
      %p94 = por %p92, %p93
      %p96 = scmp.ne.s32.totalorder %s81, %s95
      %p97 = scmp.eq.s32.totalorder %s29, 0
      %p98 = por %p96, %p97
      %s100 = sadd.s32 %s99, 1
      %p103 = scmp.eq.s32.totalorder %s23, 1
      %p104 = scmp.ne.s32.totalorder %s99, %s101
      %p105 = scmp.eq.s32.totalorder %s23, 0
      %p106 = por %p104, %p105
      %p107 = scmp.ne.s32.totalorder %s99, %s101
      %p108 = scmp.eq.s32.totalorder %s28, 1
      %p109 = por %p107, %p108
      %p110 = scmp.ne.s32.totalorder %s101, %s102
      %p111 = scmp.eq.s32.totalorder %s28, 0
      %p112 = por %p110, %p111
      %p113 = scmp.ne.s32.totalorder %s101, %s102
      %p114 = scmp.eq.s32.totalorder %s29, 1
      %p115 = por %p113, %p114
      %p117 = scmp.ne.s32.totalorder %s102, %s116
      %p118 = scmp.eq.s32.totalorder %s29, 0
      %p119 = por %p117, %p118
      %s121 = sadd.s32 %s120, 1
      %p124 = scmp.eq.s32.totalorder %s23, 1
      %p125 = scmp.ne.s32.totalorder %s120, %s122
      %p126 = scmp.eq.s32.totalorder %s23, 0
      %p127 = por %p125, %p126
      %p128 = scmp.ne.s32.totalorder %s120, %s122
      %p129 = scmp.eq.s32.totalorder %s28, 1
      %p130 = por %p128, %p129
      %p131 = scmp.ne.s32.totalorder %s122, %s123
      %p132 = scmp.eq.s32.totalorder %s28, 0
      %p133 = por %p131, %p132
      %p134 = scmp.ne.s32.totalorder %s122, %s123
      %p135 = scmp.eq.s32.totalorder %s29, 1
      %p136 = por %p134, %p135
      %p138 = scmp.ne.s32.totalorder %s123, %s137
      %p139 = scmp.eq.s32.totalorder %s29, 0
      %p140 = por %p138, %p139
      %s141 = ssub.s32 %s23, %s30
      %p142 = scmp.eq.s32.totalorder %s141, 0
      %s144 = sadd.s32 %s143, 1
      %s145 = scalar_select %p142, %s143, %s144
      %p148 = pneg %p142
      %p149 = scmp.eq.s32.totalorder %s23, 1
      %p150 = por %p148, %p149
      %p151 = scmp.ne.s32.totalorder %s143, %s146
      %p152 = scmp.eq.s32.totalorder %s23, 0
      %p153 = por %p151, %p152
      %p154 = scmp.ne.s32.totalorder %s143, %s146
      %p155 = scmp.eq.s32.totalorder %s28, 1
      %p156 = por %p154, %p155
      %p157 = scmp.ne.s32.totalorder %s146, %s147
      %p158 = scmp.eq.s32.totalorder %s28, 0
      %p159 = por %p157, %p158
      %p160 = scmp.ne.s32.totalorder %s146, %s147
      %p161 = scmp.eq.s32.totalorder %s29, 1
      %p162 = por %p160, %p161
      %p164 = scmp.ne.s32.totalorder %s147, %s163
      %p165 = scmp.eq.s32.totalorder %s29, 0
      %p166 = por %p164, %p165
      %s167 = ssub.s32 %s23, %s30
      %p168 = scmp.eq.s32.totalorder %s167, 0
      %s170 = sadd.s32 %s169, 1
      %s171 = scalar_select %p168, %s169, %s170
      %p174 = pneg %p168
      %p175 = scmp.eq.s32.totalorder %s23, 1
      %p176 = por %p174, %p175
      %p177 = scmp.ne.s32.totalorder %s169, %s172
      %p178 = scmp.eq.s32.totalorder %s23, 0
      %p179 = por %p177, %p178
      %p180 = scmp.ne.s32.totalorder %s169, %s172
      %p181 = scmp.eq.s32.totalorder %s28, 1
      %p182 = por %p180, %p181
      %p183 = scmp.ne.s32.totalorder %s172, %s173
      %p184 = scmp.eq.s32.totalorder %s28, 0
      %p185 = por %p183, %p184
      %p186 = scmp.ne.s32.totalorder %s172, %s173
      %p187 = scmp.eq.s32.totalorder %s29, 1
      %p188 = por %p186, %p187
      %p190 = scmp.ne.s32.totalorder %s173, %s189
      %p191 = scmp.eq.s32.totalorder %s29, 0
      %p192 = por %p190, %p191
      %p193 = scmp.le.s32.totalorder 1, %s23
      %p194 = scmp.lt.s32.totalorder %s23, 3
      %p195 = pnand %p193, %p194
      %p196 = pneg %p195
      // Predicated region
      $region9: #{tpu_custom_call.1} parent=5 // pred_check
        _
      $region10: #{tpu_custom_call.1} parent=5 // pred_check_branch
        %198 = sbr.rel (%p195) target = $region12
      $region11: #{tpu_custom_call.1} parent=5 // pred_region
        %s199 = ssub.s32 %s23, 1
        // Predicated region
        $region13: #{tpu_custom_call.1} parent=11 // pred_check
          %p200 = pneg %p70
        $region14: #{tpu_custom_call.1} parent=11 // pred_check_branch
          %202 = sbr.rel (%p200) target = $region16
        $region15: #{tpu_custom_call.1} parent=11 // pred_region
          %s204 = ssub.s32 512, 512
          %205 = vsyncadd [#allocation6], %s204
          %s206 = sshll.u32 [#allocation5], 4
          %s207 = int_to_ptr.vmem [resolvable:$true] %s206
          %212 = dma.hbm_to_vmem [thread:$0]  %s1, 512, %s207, [#allocation6], 128, 128, 8
        $region16: #{tpu_custom_call.1} parent=11 // pred_fallthru
          _
        // Predicated region
        $region17: #{tpu_custom_call.1} parent=11 // pred_check
          %p213 = pneg %p91
        $region18: #{tpu_custom_call.1} parent=11 // pred_check_branch
          %215 = sbr.rel (%p213) target = $region20
        $region19: #{tpu_custom_call.1} parent=11 // pred_region
          _
        $region20: #{tpu_custom_call.1} parent=11 // pred_fallthru
          _
        // Predicated region
        $region21: #{tpu_custom_call.1} parent=11 // pred_check
          %p216 = pneg %p112
        $region22: #{tpu_custom_call.1} parent=11 // pred_check_branch
          %218 = sbr.rel (%p216) target = $region24
        $region23: #{tpu_custom_call.1} parent=11 // pred_region
          %s220 = ssub.s32 512, 512
          %221 = vsyncadd [#allocation6], %s220
          %s222 = sshll.u32 [#allocation7], 4
          %s223 = int_to_ptr.vmem [resolvable:$true] %s222
          %228 = dma.hbm_to_vmem [thread:$0]  %s3, 512, %s223, [#allocation6], 128, 128, 8
        $region24: #{tpu_custom_call.1} parent=11 // pred_fallthru
          _
        // Predicated region
        $region25: #{tpu_custom_call.1} parent=11 // pred_check
          %p229 = pneg %p133
        $region26: #{tpu_custom_call.1} parent=11 // pred_check_branch
          %231 = sbr.rel (%p229) target = $region28
        $region27: #{tpu_custom_call.1} parent=11 // pred_region
          _
        $region28: #{tpu_custom_call.1} parent=11 // pred_fallthru
          _
      $region12: #{tpu_custom_call.1} parent=5 // pred_fallthru
        _
      %p232 = scmp.lt.s32.totalorder %s23, 2
      // Predicated region
      $region29: #{tpu_custom_call.1} parent=5 // pred_check
        %p233 = pneg %p232
      $region30: #{tpu_custom_call.1} parent=5 // pred_check_branch
        %235 = sbr.rel (%p233) target = $region32
      $region31: #{tpu_custom_call.1} parent=5 // pred_region
        // Predicated region
        $region33: #{tpu_custom_call.1} parent=31 // pred_check
          %p236 = pneg %p43
        $region34: #{tpu_custom_call.1} parent=31 // pred_check_branch
          %238 = sbr.rel (%p236) target = $region36
        $region35: #{tpu_custom_call.1} parent=31 // pred_region
          %s239 = sand.u32 %s33, 1
          %s240 = scalar_lea.sflag [#allocation3], %s239
          %s241 = sand.u32 %s33, 1
          %s242 = smul.addr %s241, 8
          %s243 = scalar_lea.vmem [#allocation2], %s242
          %s245 = ssub.s32 128, 128
          %246 = vsyncadd %s240, %s245
          %s247 = smul.addr %s23, 128
          %s248 = scalar_lea.hbm %s0, %s247
          %s250 = sshll.u32 %s243, 4
          %s251 = int_to_ptr.vmem [resolvable:$true] %s250
          %253 = dma.hbm_to_vmem [thread:$0]  %s248, 128, %s251, %s240
        $region36: #{tpu_custom_call.1} parent=31 // pred_fallthru
          _
      $region32: #{tpu_custom_call.1} parent=5 // pred_fallthru
        _
      %p254 = scmp.le.s32.totalorder 1, %s23
      %p255 = scmp.lt.s32.totalorder %s23, 3
      %p256 = pnand %p254, %p255
      %p257 = pneg %p256
      // Predicated region
      $region37: #{tpu_custom_call.1} parent=5 // pred_check
        _
      $region38: #{tpu_custom_call.1} parent=5 // pred_check_branch
        %259 = sbr.rel (%p256) target = $region40
      $region39: #{tpu_custom_call.1} parent=5 // pred_region
        %s260 = ssub.s32 %s23, 1
        %s261 = sand.u32 %s36, 1
        %s262 = scalar_lea.sflag [#allocation3], %s261
        %s263 = sand.u32 %s36, 1
        %s264 = smul.addr %s263, 8
        %s265 = scalar_lea.vmem [#allocation2], %s264
        // Predicated region
        $region41: #{tpu_custom_call.1} parent=39 // pred_check
          %p266 = pneg %p49
        $region42: #{tpu_custom_call.1} parent=39 // pred_check_branch
          %268 = sbr.rel (%p266) target = $region44
        $region43: #{tpu_custom_call.1} parent=39 // pred_region
          %269 = dma.done %s262, 128
        $region44: #{tpu_custom_call.1} parent=39 // pred_fallthru
          _
        // Predicated region
        $region45: #{tpu_custom_call.1} parent=39 // pred_check
          %p270 = pneg %p70
        $region46: #{tpu_custom_call.1} parent=39 // pred_check_branch
          %272 = sbr.rel (%p270) target = $region48
        $region47: #{tpu_custom_call.1} parent=39 // pred_region
          %273 = dma.done [#allocation6], 512
        $region48: #{tpu_custom_call.1} parent=39 // pred_fallthru
          _
        // Predicated region
        $region49: #{tpu_custom_call.1} parent=39 // pred_check
          %p274 = pneg %p112
        $region50: #{tpu_custom_call.1} parent=39 // pred_check_branch
          %276 = sbr.rel (%p274) target = $region52
        $region51: #{tpu_custom_call.1} parent=39 // pred_region
          %277 = dma.done [#allocation6], 512
        $region52: #{tpu_custom_call.1} parent=39 // pred_fallthru
          _
        %s278 = sand.u32 %s36, 1
        %s279 = scalar_lea.sflag [#allocation3], %s278
        %s280 = sand.u32 %s36, 1
        %s281 = smul.addr %s280, 8
        %s282 = scalar_lea.vmem [#allocation2], %s281
        %p283 = pneg %p49
        %p284 = pneg %p46
        %p285 = pneg %p70
        %p286 = pneg %p67
        %p287 = pneg %p91
        %p288 = pneg %p88
        %p289 = pneg %p112
        %p290 = pneg %p109
        %p291 = pneg %p133
        %p292 = pneg %p130
        %p293 = pneg %p159
        %p294 = pneg %p156
        %s295 = sand.u32 %s146, 1
        %s296 = scalar_lea.sflag [#allocation4], %s295
        %s297 = sand.u32 %s146, 1
        %s298 = smul.addr %s297, 8
        %s299 = scalar_lea.vmem [#allocation8], %s298
        %p300 = pneg %p185
        %p301 = pneg %p182
        %s302 = sand.u32 %s172, 1
        %s303 = scalar_lea.sflag [#allocation10], %s302
        %s304 = sand.u32 %s172, 1
        %s305 = smul.addr %s304, 32
        %s306 = scalar_lea.vmem [#allocation9], %s305
        %v307 = vld [vmem:[%s265] sm:$0xff]
        %v308 = vld [vmem:[#allocation5] sm:$0xff]
        %v309 = vld [vmem:[#allocation5 + $0x8] sm:$0xff]
        %v310 = vld [vmem:[#allocation5 + $0x10] sm:$0xff]
        %v311 = vld [vmem:[#allocation5 + $0x18] sm:$0xff]
        %v312 = vld [vmem:[%s2] sm:$0x1]
        %v314 = vlaneseq
        %v315 = vshrl.u32 %v314, 7
        %v316 = vsub.s32 0, %v315
        %v317 = vrot.slane %v312, %v316
        %vm319 = vcmask 261120
        %v321 = vsel %vm319, %v307, 0
        %323 = vmatprep.subr.mxu0 0.0
        %324 = vmatpush1.msra.mxu0 %v308
        %325 = vmatprep.subr.mxu0 0.0
        %326 = vmatpush1.msra.mxu0 %v309
        %327 = vmatprep.subr.mxu0 0.0
        %328 = vmatpush1.msra.mxu0 %v310
        %329 = vmatprep.subr.mxu0 0.0
        %330 = vmatpush1.msra.mxu0 %v311
        %331 = vmatprep.subr.mxu0 0.0
        %332 = vmatpush1.msra.mxu0 0.0
        %333 = vmatprep.subr.mxu0 0.0
        %334 = vmatpush1.msra.mxu0 0.0
        %335 = vmatprep.subr.mxu0 0.0
        %336 = vmatpush1.msra.mxu0 0.0
        %337 = vmatprep.subr.mxu0 0.0
        %338 = vmatpush1.msra.mxu0 0.0
        %339 = vmatprep.subr.mxu0 0.0
        %340 = vmatpush1.msra.mxu0 0.0
        %341 = vmatprep.subr.mxu0 0.0
        %342 = vmatpush1.msra.mxu0 0.0
        %343 = vmatprep.subr.mxu0 0.0
        %344 = vmatpush1.msra.mxu0 0.0
        %345 = vmatprep.subr.mxu0 0.0
        %346 = vmatpush1.msra.mxu0 0.0
        %347 = vmatprep.subr.mxu0 0.0
        %348 = vmatpush1.msra.mxu0 0.0
        %349 = vmatprep.subr.mxu0 0.0
        %350 = vmatpush1.msra.mxu0 0.0
        %351 = vmatprep.subr.mxu0 0.0
        %352 = vmatpush1.msra.mxu0 0.0
        %353 = vmatprep.subr.mxu0 0.0
        %354 = vmatpush1.msra.mxu0 0.0
        %355 = vmatprep.subr.mxu0 0.0
        %356 = vmatpush1.msra.mxu0 0.0
        %357 = vmatprep.subr.mxu0 0.0
        %358 = vmatpush1.msra.mxu0 0.0
        %359 = vmatprep.subr.mxu0 0.0
        %360 = vmatpush1.msra.mxu0 0.0
        %361 = vmatprep.subr.mxu0 0.0
        %362 = vmatpush1.msra.mxu0 0.0
        %363 = vmatprep.subr.mxu0 0.0
        %364 = vmatpush1.msra.mxu0 0.0
        %365 = vmatprep.subr.mxu0 0.0
        %366 = vmatpush1.msra.mxu0 0.0
        %367 = vmatprep.subr.mxu0 0.0
        %368 = vmatpush1.msra.mxu0 0.0
        %369 = vmatprep.subr.mxu0 0.0
        %370 = vmatpush1.msra.mxu0 0.0
        %371 = vmatprep.subr.mxu0 0.0
        %372 = vmatpush1.msra.mxu0 0.0
        %373 = vmatprep.subr.mxu0 0.0
        %374 = vmatpush1.msra.mxu0 0.0
        %375 = vmatprep.subr.mxu0 0.0
        %376 = vmatpush1.msra.mxu0 0.0
        %377 = vmatprep.subr.mxu0 0.0
        %378 = vmatpush1.msra.mxu0 0.0
        %379 = vmatprep.subr.mxu0 0.0
        %380 = vmatpush1.msra.mxu0 0.0
        %381 = vmatprep.subr.mxu0 0.0
        %382 = vmatpush1.msra.mxu0 0.0
        %383 = vmatprep.subr.mxu0 0.0
        %384 = vmatpush1.msra.mxu0 0.0
        %385 = vmatprep.subr.mxu0 0.0
        %386 = vmatpush1.msra.mxu0 0.0
        %387 = vmatprep.mubr.f32.mxu0 0.0
        %388 = vmatmul.mubr.f32.gmra.mrb[0].mxu0 %v321
        %v389 = vpop.f32.mrb[0].mxu0
        %v390 = vadd.f32 %v317, %v389
        %v391 = vpop.f32.mrb[0].mxu0
        %392 = vdwg.mxu0
        %v393 = vlaneseq
        %v394 = vshrl.u32 %v393, 7
        %v395 = vlaneseq
        %v396 = vand.u32 %v395, 127
        %vm397 = vcmp.le.s32.totalorder %v396, %v394
        %399 = vrot.lane.b32.xlu0 %v390, 96
        %v400 = vpop.permute.xlu0 %399
        %vm401 = vcmask 64512
        %v402 = vsel %vm401, %v390, 0
        %v404 = vsel %vm401, %v400, 0
        %406 = vmatprep.subr.mxu0 0.0
        %407 = vmatpush1.xpose.msra.mxu0 %v404
        %408 = vmatprep.subr.mxu0 0.0
        %409 = vmatpush1.xpose.msra.mxu0 0.0
        %410 = vmatprep.subr.mxu0 0.0
        %411 = vmatpush1.xpose.msra.mxu0 0.0
        %412 = vmatprep.subr.mxu0 0.0
        %413 = vmatpush1.xpose.msra.mxu0 0.0
        %414 = vmatprep.subr.mxu0 0.0
        %415 = vmatpush1.xpose.msra.mxu0 0.0
        %416 = vmatprep.subr.mxu0 0.0
        %417 = vmatpush1.xpose.msra.mxu0 0.0
        %418 = vmatprep.subr.mxu0 0.0
        %419 = vmatpush1.xpose.msra.mxu0 0.0
        %420 = vmatprep.subr.mxu0 0.0
        %421 = vmatpush1.xpose.msra.mxu0 0.0
        %422 = vmatprep.subr.mxu0 0.0
        %423 = vmatpush1.xpose.msra.mxu0 0.0
        %424 = vmatprep.subr.mxu0 0.0
        %425 = vmatpush1.xpose.msra.mxu0 0.0
        %426 = vmatprep.subr.mxu0 0.0
        %427 = vmatpush1.xpose.msra.mxu0 0.0
        %428 = vmatprep.subr.mxu0 0.0
        %429 = vmatpush1.xpose.msra.mxu0 0.0
        %430 = vmatprep.subr.mxu0 0.0
        %431 = vmatpush1.xpose.msra.mxu0 0.0
        %432 = vmatprep.subr.mxu0 0.0
        %433 = vmatpush1.xpose.msra.mxu0 0.0
        %434 = vmatprep.subr.mxu0 0.0
        %435 = vmatpush1.xpose.msra.mxu0 0.0
        %436 = vmatprep.subr.mxu0 0.0
        %437 = vmatpush1.xpose.msra.mxu0 0.0
        %438 = vmatprep.subr.mxu0 0.0
        %439 = vmatpush1.xpose.msra.mxu0 0.0
        %440 = vmatprep.subr.mxu0 0.0
        %441 = vmatpush1.xpose.msra.mxu0 0.0
        %442 = vmatprep.subr.mxu0 0.0
        %443 = vmatpush1.xpose.msra.mxu0 0.0
        %444 = vmatprep.subr.mxu0 0.0
        %445 = vmatpush1.xpose.msra.mxu0 0.0
        %446 = vmatprep.subr.mxu0 0.0
        %447 = vmatpush1.xpose.msra.mxu0 0.0
        %448 = vmatprep.subr.mxu0 0.0
        %449 = vmatpush1.xpose.msra.mxu0 0.0
        %450 = vmatprep.subr.mxu0 0.0
        %451 = vmatpush1.xpose.msra.mxu0 0.0
        %452 = vmatprep.subr.mxu0 0.0
        %453 = vmatpush1.xpose.msra.mxu0 0.0
        %454 = vmatprep.subr.mxu0 0.0
        %455 = vmatpush1.xpose.msra.mxu0 0.0
        %456 = vmatprep.subr.mxu0 0.0
        %457 = vmatpush1.xpose.msra.mxu0 0.0
        %458 = vmatprep.subr.mxu0 0.0
        %459 = vmatpush1.xpose.msra.mxu0 0.0
        %460 = vmatprep.subr.mxu0 0.0
        %461 = vmatpush1.xpose.msra.mxu0 0.0
        %462 = vmatprep.subr.mxu0 0.0
        %463 = vmatpush1.xpose.msra.mxu0 0.0
        %464 = vmatprep.subr.mxu0 0.0
        %465 = vmatpush1.xpose.msra.mxu0 0.0
        %466 = vmatprep.subr.mxu0 0.0
        %467 = vmatpush1.xpose.msra.mxu0 0.0
        %468 = vmatprep.subr.mxu0 0.0
        %469 = vmatpush1.xpose.msra.mxu0 0.0
        %470 = vmatprep.mubr.f32.mxu0 0.0
        %471 = vmatmul.mubr.f32.gmra.mrb[0].mxu0 %v402
        %v472 = vpop.f32.mrb[0].mxu0
        %v473 = vadd.f32 0.0, %v472
        %v474 = vpop.f32.mrb[0].mxu0
        %475 = vdwg.mxu0
        %v476 = vsel %vm397, %v473, -inf
        %v477 = vsel %vm401, %v476, -inf
        %478 = vmax.xlane.f32.xlu0 %v477
        %v479 = vpop.xlane.xlu0 %478
        %v480 = vsub.f32 %v476, %v479
        %v481 = vmul.f32 %v480, 1.442695
        %v482 = vpow.pop %v481
        %v483 = vsel %vm401, %v482, 0.0
        %484 = vadd.xlane.f32.xlu0 %v483
        %v485 = vpop.xlane.xlu0 %484
        %v486 = vrcp.pop %v485
        %v487 = vmul.f32 %v482, %v486
        %488 = vst.msk [vmem:[%s306] sm:$0xff] %vm401, %v487
        %489 = vrot.lane.b32.xlu0 %v390, 64
        %v490 = vpop.permute.xlu0 %489
        %v493 = vsel %vm401, %v487, 0
        %495 = vmatprep.subr.mxu0 0.0
        %496 = vmatpush1.msra.mxu0 %v490
        %497 = vmatprep.subr.mxu0 0.0
        %498 = vmatpush1.msra.mxu0 0.0
        %499 = vmatprep.subr.mxu0 0.0
        %500 = vmatpush1.msra.mxu0 0.0
        %501 = vmatprep.subr.mxu0 0.0
        %502 = vmatpush1.msra.mxu0 0.0
        %503 = vmatprep.subr.mxu0 0.0
        %504 = vmatpush1.msra.mxu0 0.0
        %505 = vmatprep.subr.mxu0 0.0
        %506 = vmatpush1.msra.mxu0 0.0
        %507 = vmatprep.subr.mxu0 0.0
        %508 = vmatpush1.msra.mxu0 0.0
        %509 = vmatprep.subr.mxu0 0.0
        %510 = vmatpush1.msra.mxu0 0.0
        %511 = vmatprep.subr.mxu0 0.0
        %512 = vmatpush1.msra.mxu0 0.0
        %513 = vmatprep.subr.mxu0 0.0
        %514 = vmatpush1.msra.mxu0 0.0
        %515 = vmatprep.subr.mxu0 0.0
        %516 = vmatpush1.msra.mxu0 0.0
        %517 = vmatprep.subr.mxu0 0.0
        %518 = vmatpush1.msra.mxu0 0.0
        %519 = vmatprep.subr.mxu0 0.0
        %520 = vmatpush1.msra.mxu0 0.0
        %521 = vmatprep.subr.mxu0 0.0
        %522 = vmatpush1.msra.mxu0 0.0
        %523 = vmatprep.subr.mxu0 0.0
        %524 = vmatpush1.msra.mxu0 0.0
        %525 = vmatprep.subr.mxu0 0.0
        %526 = vmatpush1.msra.mxu0 0.0
        %527 = vmatprep.subr.mxu0 0.0
        %528 = vmatpush1.msra.mxu0 0.0
        %529 = vmatprep.subr.mxu0 0.0
        %530 = vmatpush1.msra.mxu0 0.0
        %531 = vmatprep.subr.mxu0 0.0
        %532 = vmatpush1.msra.mxu0 0.0
        %533 = vmatprep.subr.mxu0 0.0
        %534 = vmatpush1.msra.mxu0 0.0
        %535 = vmatprep.subr.mxu0 0.0
        %536 = vmatpush1.msra.mxu0 0.0
        %537 = vmatprep.subr.mxu0 0.0
        %538 = vmatpush1.msra.mxu0 0.0
        %539 = vmatprep.subr.mxu0 0.0
        %540 = vmatpush1.msra.mxu0 0.0
        %541 = vmatprep.subr.mxu0 0.0
        %542 = vmatpush1.msra.mxu0 0.0
        %543 = vmatprep.subr.mxu0 0.0
        %544 = vmatpush1.msra.mxu0 0.0
        %545 = vmatprep.subr.mxu0 0.0
        %546 = vmatpush1.msra.mxu0 0.0
        %547 = vmatprep.subr.mxu0 0.0
        %548 = vmatpush1.msra.mxu0 0.0
        %549 = vmatprep.subr.mxu0 0.0
        %550 = vmatpush1.msra.mxu0 0.0
        %551 = vmatprep.subr.mxu0 0.0
        %552 = vmatpush1.msra.mxu0 0.0
        %553 = vmatprep.subr.mxu0 0.0
        %554 = vmatpush1.msra.mxu0 0.0
        %555 = vmatprep.subr.mxu0 0.0
        %556 = vmatpush1.msra.mxu0 0.0
        %557 = vmatprep.subr.mxu0 0.0
        %558 = vmatpush1.msra.mxu0 0.0
        %559 = vmatprep.mubr.f32.mxu0 0.0
        %560 = vmatmul.mubr.f32.gmra.mrb[0].mxu0 %v493
        %v561 = vpop.f32.mrb[0].mxu0
        %v562 = vadd.f32 0.0, %v561
        %v563 = vpop.f32.mrb[0].mxu0
        %564 = vdwg.mxu0
        %565 = vrot.lane.b32.xlu0 %v390, 120
        %v566 = vpop.permute.xlu0 %565
        %567 = vrot.lane.b32.xlu0 %v390, 88
        %v568 = vpop.permute.xlu0 %567
        %v569 = vsel %vm401, %v566, 0
        %v571 = vsel %vm401, %v568, 0
        %573 = vmatprep.subr.mxu0 0.0
        %574 = vmatpush1.xpose.msra.mxu0 %v571
        %575 = vmatprep.subr.mxu0 0.0
        %576 = vmatpush1.xpose.msra.mxu0 0.0
        %577 = vmatprep.subr.mxu0 0.0
        %578 = vmatpush1.xpose.msra.mxu0 0.0
        %579 = vmatprep.subr.mxu0 0.0
        %580 = vmatpush1.xpose.msra.mxu0 0.0
        %581 = vmatprep.subr.mxu0 0.0
        %582 = vmatpush1.xpose.msra.mxu0 0.0
        %583 = vmatprep.subr.mxu0 0.0
        %584 = vmatpush1.xpose.msra.mxu0 0.0
        %585 = vmatprep.subr.mxu0 0.0
        %586 = vmatpush1.xpose.msra.mxu0 0.0
        %587 = vmatprep.subr.mxu0 0.0
        %588 = vmatpush1.xpose.msra.mxu0 0.0
        %589 = vmatprep.subr.mxu0 0.0
        %590 = vmatpush1.xpose.msra.mxu0 0.0
        %591 = vmatprep.subr.mxu0 0.0
        %592 = vmatpush1.xpose.msra.mxu0 0.0
        %593 = vmatprep.subr.mxu0 0.0
        %594 = vmatpush1.xpose.msra.mxu0 0.0
        %595 = vmatprep.subr.mxu0 0.0
        %596 = vmatpush1.xpose.msra.mxu0 0.0
        %597 = vmatprep.subr.mxu0 0.0
        %598 = vmatpush1.xpose.msra.mxu0 0.0
        %599 = vmatprep.subr.mxu0 0.0
        %600 = vmatpush1.xpose.msra.mxu0 0.0
        %601 = vmatprep.subr.mxu0 0.0
        %602 = vmatpush1.xpose.msra.mxu0 0.0
        %603 = vmatprep.subr.mxu0 0.0
        %604 = vmatpush1.xpose.msra.mxu0 0.0
        %605 = vmatprep.subr.mxu0 0.0
        %606 = vmatpush1.xpose.msra.mxu0 0.0
        %607 = vmatprep.subr.mxu0 0.0
        %608 = vmatpush1.xpose.msra.mxu0 0.0
        %609 = vmatprep.subr.mxu0 0.0
        %610 = vmatpush1.xpose.msra.mxu0 0.0
        %611 = vmatprep.subr.mxu0 0.0
        %612 = vmatpush1.xpose.msra.mxu0 0.0
        %613 = vmatprep.subr.mxu0 0.0
        %614 = vmatpush1.xpose.msra.mxu0 0.0
        %615 = vmatprep.subr.mxu0 0.0
        %616 = vmatpush1.xpose.msra.mxu0 0.0
        %617 = vmatprep.subr.mxu0 0.0
        %618 = vmatpush1.xpose.msra.mxu0 0.0
        %619 = vmatprep.subr.mxu0 0.0
        %620 = vmatpush1.xpose.msra.mxu0 0.0
        %621 = vmatprep.subr.mxu0 0.0
        %622 = vmatpush1.xpose.msra.mxu0 0.0
        %623 = vmatprep.subr.mxu0 0.0
        %624 = vmatpush1.xpose.msra.mxu0 0.0
        %625 = vmatprep.subr.mxu0 0.0
        %626 = vmatpush1.xpose.msra.mxu0 0.0
        %627 = vmatprep.subr.mxu0 0.0
        %628 = vmatpush1.xpose.msra.mxu0 0.0
        %629 = vmatprep.subr.mxu0 0.0
        %630 = vmatpush1.xpose.msra.mxu0 0.0
        %631 = vmatprep.subr.mxu0 0.0
        %632 = vmatpush1.xpose.msra.mxu0 0.0
        %633 = vmatprep.subr.mxu0 0.0
        %634 = vmatpush1.xpose.msra.mxu0 0.0
        %635 = vmatprep.subr.mxu0 0.0
        %636 = vmatpush1.xpose.msra.mxu0 0.0
        %637 = vmatprep.mubr.f32.mxu0 0.0
        %638 = vmatmul.mubr.f32.gmra.mrb[0].mxu0 %v569
        %v639 = vpop.f32.mrb[0].mxu0
        %v640 = vadd.f32 0.0, %v639
        %v641 = vpop.f32.mrb[0].mxu0
        %642 = vdwg.mxu0
        %v643 = vsel %vm397, %v640, -inf
        %v644 = vsel %vm401, %v643, -inf
        %645 = vmax.xlane.f32.xlu0 %v644
        %v646 = vpop.xlane.xlu0 %645
        %v647 = vsub.f32 %v643, %v646
        %v648 = vmul.f32 %v647, 1.442695
        %v649 = vpow.pop %v648
        %v650 = vsel %vm401, %v649, 0.0
        %651 = vadd.xlane.f32.xlu0 %v650
        %v652 = vpop.xlane.xlu0 %651
        %v653 = vrcp.pop %v652
        %v654 = vmul.f32 %v649, %v653
        %s655 = scalar_lea.vmem %s306, 8 [#allocation9]
        %656 = vst.msk [vmem:[%s655] sm:$0xff] %vm401, %v654
        %657 = vrot.lane.b32.xlu0 %v390, 56
        %v658 = vpop.permute.xlu0 %657
        %v661 = vsel %vm401, %v654, 0
        %663 = vmatprep.subr.mxu0 0.0
        %664 = vmatpush1.msra.mxu0 %v658
        %665 = vmatprep.subr.mxu0 0.0
        %666 = vmatpush1.msra.mxu0 0.0
        %667 = vmatprep.subr.mxu0 0.0
        %668 = vmatpush1.msra.mxu0 0.0
        %669 = vmatprep.subr.mxu0 0.0
        %670 = vmatpush1.msra.mxu0 0.0
        %671 = vmatprep.subr.mxu0 0.0
        %672 = vmatpush1.msra.mxu0 0.0
        %673 = vmatprep.subr.mxu0 0.0
        %674 = vmatpush1.msra.mxu0 0.0
        %675 = vmatprep.subr.mxu0 0.0
        %676 = vmatpush1.msra.mxu0 0.0
        %677 = vmatprep.subr.mxu0 0.0
        %678 = vmatpush1.msra.mxu0 0.0
        %679 = vmatprep.subr.mxu0 0.0
        %680 = vmatpush1.msra.mxu0 0.0
        %681 = vmatprep.subr.mxu0 0.0
        %682 = vmatpush1.msra.mxu0 0.0
        %683 = vmatprep.subr.mxu0 0.0
        %684 = vmatpush1.msra.mxu0 0.0
        %685 = vmatprep.subr.mxu0 0.0
        %686 = vmatpush1.msra.mxu0 0.0
        %687 = vmatprep.subr.mxu0 0.0
        %688 = vmatpush1.msra.mxu0 0.0
        %689 = vmatprep.subr.mxu0 0.0
        %690 = vmatpush1.msra.mxu0 0.0
        %691 = vmatprep.subr.mxu0 0.0
        %692 = vmatpush1.msra.mxu0 0.0
        %693 = vmatprep.subr.mxu0 0.0
        %694 = vmatpush1.msra.mxu0 0.0
        %695 = vmatprep.subr.mxu0 0.0
        %696 = vmatpush1.msra.mxu0 0.0
        %697 = vmatprep.subr.mxu0 0.0
        %698 = vmatpush1.msra.mxu0 0.0
        %699 = vmatprep.subr.mxu0 0.0
        %700 = vmatpush1.msra.mxu0 0.0
        %701 = vmatprep.subr.mxu0 0.0
        %702 = vmatpush1.msra.mxu0 0.0
        %703 = vmatprep.subr.mxu0 0.0
        %704 = vmatpush1.msra.mxu0 0.0
        %705 = vmatprep.subr.mxu0 0.0
        %706 = vmatpush1.msra.mxu0 0.0
        %707 = vmatprep.subr.mxu0 0.0
        %708 = vmatpush1.msra.mxu0 0.0
        %709 = vmatprep.subr.mxu0 0.0
        %710 = vmatpush1.msra.mxu0 0.0
        %711 = vmatprep.subr.mxu0 0.0
        %712 = vmatpush1.msra.mxu0 0.0
        %713 = vmatprep.subr.mxu0 0.0
        %714 = vmatpush1.msra.mxu0 0.0
        %715 = vmatprep.subr.mxu0 0.0
        %716 = vmatpush1.msra.mxu0 0.0
        %717 = vmatprep.subr.mxu0 0.0
        %718 = vmatpush1.msra.mxu0 0.0
        %719 = vmatprep.subr.mxu0 0.0
        %720 = vmatpush1.msra.mxu0 0.0
        %721 = vmatprep.subr.mxu0 0.0
        %722 = vmatpush1.msra.mxu0 0.0
        %723 = vmatprep.subr.mxu0 0.0
        %724 = vmatpush1.msra.mxu0 0.0
        %725 = vmatprep.subr.mxu0 0.0
        %726 = vmatpush1.msra.mxu0 0.0
        %727 = vmatprep.mubr.f32.mxu0 0.0
        %728 = vmatmul.mubr.f32.gmra.mrb[0].mxu0 %v661
        %v729 = vpop.f32.mrb[0].mxu0
        %v730 = vadd.f32 0.0, %v729
        %v731 = vpop.f32.mrb[0].mxu0
        %732 = vdwg.mxu0
        %733 = vrot.lane.b32.xlu0 %v390, 112
        %v734 = vpop.permute.xlu0 %733
        %735 = vrot.lane.b32.xlu0 %v390, 80
        %v736 = vpop.permute.xlu0 %735
        %v737 = vsel %vm401, %v734, 0
        %v739 = vsel %vm401, %v736, 0
        %741 = vmatprep.subr.mxu0 0.0
        %742 = vmatpush1.xpose.msra.mxu0 %v739
        %743 = vmatprep.subr.mxu0 0.0
        %744 = vmatpush1.xpose.msra.mxu0 0.0
        %745 = vmatprep.subr.mxu0 0.0
        %746 = vmatpush1.xpose.msra.mxu0 0.0
        %747 = vmatprep.subr.mxu0 0.0
        %748 = vmatpush1.xpose.msra.mxu0 0.0
        %749 = vmatprep.subr.mxu0 0.0
        %750 = vmatpush1.xpose.msra.mxu0 0.0
        %751 = vmatprep.subr.mxu0 0.0
        %752 = vmatpush1.xpose.msra.mxu0 0.0
        %753 = vmatprep.subr.mxu0 0.0
        %754 = vmatpush1.xpose.msra.mxu0 0.0
        %755 = vmatprep.subr.mxu0 0.0
        %756 = vmatpush1.xpose.msra.mxu0 0.0
        %757 = vmatprep.subr.mxu0 0.0
        %758 = vmatpush1.xpose.msra.mxu0 0.0
        %759 = vmatprep.subr.mxu0 0.0
        %760 = vmatpush1.xpose.msra.mxu0 0.0
        %761 = vmatprep.subr.mxu0 0.0
        %762 = vmatpush1.xpose.msra.mxu0 0.0
        %763 = vmatprep.subr.mxu0 0.0
        %764 = vmatpush1.xpose.msra.mxu0 0.0
        %765 = vmatprep.subr.mxu0 0.0
        %766 = vmatpush1.xpose.msra.mxu0 0.0
        %767 = vmatprep.subr.mxu0 0.0
        %768 = vmatpush1.xpose.msra.mxu0 0.0
        %769 = vmatprep.subr.mxu0 0.0
        %770 = vmatpush1.xpose.msra.mxu0 0.0
        %771 = vmatprep.subr.mxu0 0.0
        %772 = vmatpush1.xpose.msra.mxu0 0.0
        %773 = vmatprep.subr.mxu0 0.0
        %774 = vmatpush1.xpose.msra.mxu0 0.0
        %775 = vmatprep.subr.mxu0 0.0
        %776 = vmatpush1.xpose.msra.mxu0 0.0
        %777 = vmatprep.subr.mxu0 0.0
        %778 = vmatpush1.xpose.msra.mxu0 0.0
        %779 = vmatprep.subr.mxu0 0.0
        %780 = vmatpush1.xpose.msra.mxu0 0.0
        %781 = vmatprep.subr.mxu0 0.0
        %782 = vmatpush1.xpose.msra.mxu0 0.0
        %783 = vmatprep.subr.mxu0 0.0
        %784 = vmatpush1.xpose.msra.mxu0 0.0
        %785 = vmatprep.subr.mxu0 0.0
        %786 = vmatpush1.xpose.msra.mxu0 0.0
        %787 = vmatprep.subr.mxu0 0.0
        %788 = vmatpush1.xpose.msra.mxu0 0.0
        %789 = vmatprep.subr.mxu0 0.0
        %790 = vmatpush1.xpose.msra.mxu0 0.0
        %791 = vmatprep.subr.mxu0 0.0
        %792 = vmatpush1.xpose.msra.mxu0 0.0
        %793 = vmatprep.subr.mxu0 0.0
        %794 = vmatpush1.xpose.msra.mxu0 0.0
        %795 = vmatprep.subr.mxu0 0.0
        %796 = vmatpush1.xpose.msra.mxu0 0.0
        %797 = vmatprep.subr.mxu0 0.0
        %798 = vmatpush1.xpose.msra.mxu0 0.0
        %799 = vmatprep.subr.mxu0 0.0
        %800 = vmatpush1.xpose.msra.mxu0 0.0
        %801 = vmatprep.subr.mxu0 0.0
        %802 = vmatpush1.xpose.msra.mxu0 0.0
        %803 = vmatprep.subr.mxu0 0.0
        %804 = vmatpush1.xpose.msra.mxu0 0.0
        %805 = vmatprep.mubr.f32.mxu0 0.0
        %806 = vmatmul.mubr.f32.gmra.mrb[0].mxu0 %v737
        %v807 = vpop.f32.mrb[0].mxu0
        %v808 = vadd.f32 0.0, %v807
        %v809 = vpop.f32.mrb[0].mxu0
        %810 = vdwg.mxu0
        %v811 = vsel %vm397, %v808, -inf
        %v812 = vsel %vm401, %v811, -inf
        %813 = vmax.xlane.f32.xlu0 %v812
        %v814 = vpop.xlane.xlu0 %813
        %v815 = vsub.f32 %v811, %v814
        %v816 = vmul.f32 %v815, 1.442695
        %v817 = vpow.pop %v816
        %v818 = vsel %vm401, %v817, 0.0
        %819 = vadd.xlane.f32.xlu0 %v818
        %v820 = vpop.xlane.xlu0 %819
        %v821 = vrcp.pop %v820
        %v822 = vmul.f32 %v817, %v821
        %s823 = scalar_lea.vmem %s306, 16 [#allocation9]
        %824 = vst.msk [vmem:[%s823] sm:$0xff] %vm401, %v822
        %825 = vrot.lane.b32.xlu0 %v390, 48
        %v826 = vpop.permute.xlu0 %825
        %v829 = vsel %vm401, %v822, 0
        %831 = vmatprep.subr.mxu0 0.0
        %832 = vmatpush1.msra.mxu0 %v826
        %833 = vmatprep.subr.mxu0 0.0
        %834 = vmatpush1.msra.mxu0 0.0
        %835 = vmatprep.subr.mxu0 0.0
        %836 = vmatpush1.msra.mxu0 0.0
        %837 = vmatprep.subr.mxu0 0.0
        %838 = vmatpush1.msra.mxu0 0.0
        %839 = vmatprep.subr.mxu0 0.0
        %840 = vmatpush1.msra.mxu0 0.0
        %841 = vmatprep.subr.mxu0 0.0
        %842 = vmatpush1.msra.mxu0 0.0
        %843 = vmatprep.subr.mxu0 0.0
        %844 = vmatpush1.msra.mxu0 0.0
        %845 = vmatprep.subr.mxu0 0.0
        %846 = vmatpush1.msra.mxu0 0.0
        %847 = vmatprep.subr.mxu0 0.0
        %848 = vmatpush1.msra.mxu0 0.0
        %849 = vmatprep.subr.mxu0 0.0
        %850 = vmatpush1.msra.mxu0 0.0
        %851 = vmatprep.subr.mxu0 0.0
        %852 = vmatpush1.msra.mxu0 0.0
        %853 = vmatprep.subr.mxu0 0.0
        %854 = vmatpush1.msra.mxu0 0.0
        %855 = vmatprep.subr.mxu0 0.0
        %856 = vmatpush1.msra.mxu0 0.0
        %857 = vmatprep.subr.mxu0 0.0
        %858 = vmatpush1.msra.mxu0 0.0
        %859 = vmatprep.subr.mxu0 0.0
        %860 = vmatpush1.msra.mxu0 0.0
        %861 = vmatprep.subr.mxu0 0.0
        %862 = vmatpush1.msra.mxu0 0.0
        %863 = vmatprep.subr.mxu0 0.0
        %864 = vmatpush1.msra.mxu0 0.0
        %865 = vmatprep.subr.mxu0 0.0
        %866 = vmatpush1.msra.mxu0 0.0
        %867 = vmatprep.subr.mxu0 0.0
        %868 = vmatpush1.msra.mxu0 0.0
        %869 = vmatprep.subr.mxu0 0.0
        %870 = vmatpush1.msra.mxu0 0.0
        %871 = vmatprep.subr.mxu0 0.0
        %872 = vmatpush1.msra.mxu0 0.0
        %873 = vmatprep.subr.mxu0 0.0
        %874 = vmatpush1.msra.mxu0 0.0
        %875 = vmatprep.subr.mxu0 0.0
        %876 = vmatpush1.msra.mxu0 0.0
        %877 = vmatprep.subr.mxu0 0.0
        %878 = vmatpush1.msra.mxu0 0.0
        %879 = vmatprep.subr.mxu0 0.0
        %880 = vmatpush1.msra.mxu0 0.0
        %881 = vmatprep.subr.mxu0 0.0
        %882 = vmatpush1.msra.mxu0 0.0
        %883 = vmatprep.subr.mxu0 0.0
        %884 = vmatpush1.msra.mxu0 0.0
        %885 = vmatprep.subr.mxu0 0.0
        %886 = vmatpush1.msra.mxu0 0.0
        %887 = vmatprep.subr.mxu0 0.0
        %888 = vmatpush1.msra.mxu0 0.0
        %889 = vmatprep.subr.mxu0 0.0
        %890 = vmatpush1.msra.mxu0 0.0
        %891 = vmatprep.subr.mxu0 0.0
        %892 = vmatpush1.msra.mxu0 0.0
        %893 = vmatprep.subr.mxu0 0.0
        %894 = vmatpush1.msra.mxu0 0.0
        %895 = vmatprep.mubr.f32.mxu0 0.0
        %896 = vmatmul.mubr.f32.gmra.mrb[0].mxu0 %v829
        %v897 = vpop.f32.mrb[0].mxu0
        %v898 = vadd.f32 0.0, %v897
        %v899 = vpop.f32.mrb[0].mxu0
        %900 = vdwg.mxu0
        %901 = vrot.lane.b32.xlu0 %v390, 104
        %v902 = vpop.permute.xlu0 %901
        %903 = vrot.lane.b32.xlu0 %v390, 72
        %v904 = vpop.permute.xlu0 %903
        %v905 = vsel %vm401, %v902, 0
        %v907 = vsel %vm401, %v904, 0
        %909 = vmatprep.subr.mxu0 0.0
        %910 = vmatpush1.xpose.msra.mxu0 %v907
        %911 = vmatprep.subr.mxu0 0.0
        %912 = vmatpush1.xpose.msra.mxu0 0.0
        %913 = vmatprep.subr.mxu0 0.0
        %914 = vmatpush1.xpose.msra.mxu0 0.0
        %915 = vmatprep.subr.mxu0 0.0
        %916 = vmatpush1.xpose.msra.mxu0 0.0
        %917 = vmatprep.subr.mxu0 0.0
        %918 = vmatpush1.xpose.msra.mxu0 0.0
        %919 = vmatprep.subr.mxu0 0.0
        %920 = vmatpush1.xpose.msra.mxu0 0.0
        %921 = vmatprep.subr.mxu0 0.0
        %922 = vmatpush1.xpose.msra.mxu0 0.0
        %923 = vmatprep.subr.mxu0 0.0
        %924 = vmatpush1.xpose.msra.mxu0 0.0
        %925 = vmatprep.subr.mxu0 0.0
        %926 = vmatpush1.xpose.msra.mxu0 0.0
        %927 = vmatprep.subr.mxu0 0.0
        %928 = vmatpush1.xpose.msra.mxu0 0.0
        %929 = vmatprep.subr.mxu0 0.0
        %930 = vmatpush1.xpose.msra.mxu0 0.0
        %931 = vmatprep.subr.mxu0 0.0
        %932 = vmatpush1.xpose.msra.mxu0 0.0
        %933 = vmatprep.subr.mxu0 0.0
        %934 = vmatpush1.xpose.msra.mxu0 0.0
        %935 = vmatprep.subr.mxu0 0.0
        %936 = vmatpush1.xpose.msra.mxu0 0.0
        %937 = vmatprep.subr.mxu0 0.0
        %938 = vmatpush1.xpose.msra.mxu0 0.0
        %939 = vmatprep.subr.mxu0 0.0
        %940 = vmatpush1.xpose.msra.mxu0 0.0
        %941 = vmatprep.subr.mxu0 0.0
        %942 = vmatpush1.xpose.msra.mxu0 0.0
        %943 = vmatprep.subr.mxu0 0.0
        %944 = vmatpush1.xpose.msra.mxu0 0.0
        %945 = vmatprep.subr.mxu0 0.0
        %946 = vmatpush1.xpose.msra.mxu0 0.0
        %947 = vmatprep.subr.mxu0 0.0
        %948 = vmatpush1.xpose.msra.mxu0 0.0
        %949 = vmatprep.subr.mxu0 0.0
        %950 = vmatpush1.xpose.msra.mxu0 0.0
        %951 = vmatprep.subr.mxu0 0.0
        %952 = vmatpush1.xpose.msra.mxu0 0.0
        %953 = vmatprep.subr.mxu0 0.0
        %954 = vmatpush1.xpose.msra.mxu0 0.0
        %955 = vmatprep.subr.mxu0 0.0
        %956 = vmatpush1.xpose.msra.mxu0 0.0
        %957 = vmatprep.subr.mxu0 0.0
        %958 = vmatpush1.xpose.msra.mxu0 0.0
        %959 = vmatprep.subr.mxu0 0.0
        %960 = vmatpush1.xpose.msra.mxu0 0.0
        %961 = vmatprep.subr.mxu0 0.0
        %962 = vmatpush1.xpose.msra.mxu0 0.0
        %963 = vmatprep.subr.mxu0 0.0
        %964 = vmatpush1.xpose.msra.mxu0 0.0
        %965 = vmatprep.subr.mxu0 0.0
        %966 = vmatpush1.xpose.msra.mxu0 0.0
        %967 = vmatprep.subr.mxu0 0.0
        %968 = vmatpush1.xpose.msra.mxu0 0.0
        %969 = vmatprep.subr.mxu0 0.0
        %970 = vmatpush1.xpose.msra.mxu0 0.0
        %971 = vmatprep.subr.mxu0 0.0
        %972 = vmatpush1.xpose.msra.mxu0 0.0
        %973 = vmatprep.mubr.f32.mxu0 0.0
        %974 = vmatmul.mubr.f32.gmra.mrb[0].mxu0 %v905
        %v975 = vpop.f32.mrb[0].mxu0
        %v976 = vadd.f32 0.0, %v975
        %v977 = vpop.f32.mrb[0].mxu0
        %978 = vdwg.mxu0
        %v979 = vsel %vm397, %v976, -inf
        %v980 = vsel %vm401, %v979, -inf
        %981 = vmax.xlane.f32.xlu0 %v980
        %v982 = vpop.xlane.xlu0 %981
        %v983 = vsub.f32 %v979, %v982
        %v984 = vmul.f32 %v983, 1.442695
        %v985 = vpow.pop %v984
        %v986 = vsel %vm401, %v985, 0.0
        %987 = vadd.xlane.f32.xlu0 %v986
        %v988 = vpop.xlane.xlu0 %987
        %v989 = vrcp.pop %v988
        %v990 = vmul.f32 %v985, %v989
        %s991 = scalar_lea.vmem %s306, 24 [#allocation9]
        %992 = vst.msk [vmem:[%s991] sm:$0xff] %vm401, %v990
        %993 = vrot.lane.b32.xlu0 %v390, 40
        %v994 = vpop.permute.xlu0 %993
        %v997 = vsel %vm401, %v990, 0
        %999 = vmatprep.subr.mxu0 0.0
        %1000 = vmatpush1.msra.mxu0 %v994
        %1001 = vmatprep.subr.mxu0 0.0
        %1002 = vmatpush1.msra.mxu0 0.0
        %1003 = vmatprep.subr.mxu0 0.0
        %1004 = vmatpush1.msra.mxu0 0.0
        %1005 = vmatprep.subr.mxu0 0.0
        %1006 = vmatpush1.msra.mxu0 0.0
        %1007 = vmatprep.subr.mxu0 0.0
        %1008 = vmatpush1.msra.mxu0 0.0
        %1009 = vmatprep.subr.mxu0 0.0
        %1010 = vmatpush1.msra.mxu0 0.0
        %1011 = vmatprep.subr.mxu0 0.0
        %1012 = vmatpush1.msra.mxu0 0.0
        %1013 = vmatprep.subr.mxu0 0.0
        %1014 = vmatpush1.msra.mxu0 0.0
        %1015 = vmatprep.subr.mxu0 0.0
        %1016 = vmatpush1.msra.mxu0 0.0
        %1017 = vmatprep.subr.mxu0 0.0
        %1018 = vmatpush1.msra.mxu0 0.0
        %1019 = vmatprep.subr.mxu0 0.0
        %1020 = vmatpush1.msra.mxu0 0.0
        %1021 = vmatprep.subr.mxu0 0.0
        %1022 = vmatpush1.msra.mxu0 0.0
        %1023 = vmatprep.subr.mxu0 0.0
        %1024 = vmatpush1.msra.mxu0 0.0
        %1025 = vmatprep.subr.mxu0 0.0
        %1026 = vmatpush1.msra.mxu0 0.0
        %1027 = vmatprep.subr.mxu0 0.0
        %1028 = vmatpush1.msra.mxu0 0.0
        %1029 = vmatprep.subr.mxu0 0.0
        %1030 = vmatpush1.msra.mxu0 0.0
        %1031 = vmatprep.subr.mxu0 0.0
        %1032 = vmatpush1.msra.mxu0 0.0
        %1033 = vmatprep.subr.mxu0 0.0
        %1034 = vmatpush1.msra.mxu0 0.0
        %1035 = vmatprep.subr.mxu0 0.0
        %1036 = vmatpush1.msra.mxu0 0.0
        %1037 = vmatprep.subr.mxu0 0.0
        %1038 = vmatpush1.msra.mxu0 0.0
        %1039 = vmatprep.subr.mxu0 0.0
        %1040 = vmatpush1.msra.mxu0 0.0
        %1041 = vmatprep.subr.mxu0 0.0
        %1042 = vmatpush1.msra.mxu0 0.0
        %1043 = vmatprep.subr.mxu0 0.0
        %1044 = vmatpush1.msra.mxu0 0.0
        %1045 = vmatprep.subr.mxu0 0.0
        %1046 = vmatpush1.msra.mxu0 0.0
        %1047 = vmatprep.subr.mxu0 0.0
        %1048 = vmatpush1.msra.mxu0 0.0
        %1049 = vmatprep.subr.mxu0 0.0
        %1050 = vmatpush1.msra.mxu0 0.0
        %1051 = vmatprep.subr.mxu0 0.0
        %1052 = vmatpush1.msra.mxu0 0.0
        %1053 = vmatprep.subr.mxu0 0.0
        %1054 = vmatpush1.msra.mxu0 0.0
        %1055 = vmatprep.subr.mxu0 0.0
        %1056 = vmatpush1.msra.mxu0 0.0
        %1057 = vmatprep.subr.mxu0 0.0
        %1058 = vmatpush1.msra.mxu0 0.0
        %1059 = vmatprep.subr.mxu0 0.0
        %1060 = vmatpush1.msra.mxu0 0.0
        %1061 = vmatprep.subr.mxu0 0.0
        %1062 = vmatpush1.msra.mxu0 0.0
        %1063 = vmatprep.mubr.f32.mxu0 0.0
        %1064 = vmatmul.mubr.f32.gmra.mrb[0].mxu0 %v997
        %v1065 = vpop.f32.mrb[0].mxu0
        %v1066 = vadd.f32 0.0, %v1065
        %v1067 = vpop.f32.mrb[0].mxu0
        %1068 = vdwg.mxu0
        %1070 = vrot.lane.b32.xlu0 %v730, 8
        %v1071 = vpop.permute.xlu0 %1070
        %1074 = vrot.lane.b32.xlu0 %v898, 16
        %v1075 = vpop.permute.xlu0 %1074
        %1078 = vrot.lane.b32.xlu0 %v1066, 24
        %v1079 = vpop.permute.xlu0 %1078
        %v1081 = vsel %vm401, %v562, %v1071
        %vm1082 = vcmask 130048
        %v1083 = vsel %vm1082, %v1081, %v1075
        %vm1084 = vcmask 195584
        %v1085 = vsel %vm1084, %v1083, %v1079
        %v1086 = vld [vmem:[#allocation7] sm:$0xff]
        %v1087 = vld [vmem:[#allocation7 + $0x8] sm:$0xff]
        %v1088 = vld [vmem:[#allocation7 + $0x10] sm:$0xff]
        %v1089 = vld [vmem:[#allocation7 + $0x18] sm:$0xff]
        %v1090 = vld [vmem:[%s4] sm:$0x1]
        %v1092 = vlaneseq
        %v1093 = vshrl.u32 %v1092, 7
        %v1094 = vsub.s32 0, %v1093
        %v1095 = vrot.slane %v1090, %v1094
        %v1098 = vsel %vm319, %v1085, 0
        %1100 = vmatprep.subr.mxu0 0.0
        %1101 = vmatpush1.msra.mxu0 %v1086
        %1102 = vmatprep.subr.mxu0 0.0
        %1103 = vmatpush1.msra.mxu0 %v1087
        %1104 = vmatprep.subr.mxu0 0.0
        %1105 = vmatpush1.msra.mxu0 %v1088
        %1106 = vmatprep.subr.mxu0 0.0
        %1107 = vmatpush1.msra.mxu0 %v1089
        %1108 = vmatprep.subr.mxu0 0.0
        %1109 = vmatpush1.msra.mxu0 0.0
        %1110 = vmatprep.subr.mxu0 0.0
        %1111 = vmatpush1.msra.mxu0 0.0
        %1112 = vmatprep.subr.mxu0 0.0
        %1113 = vmatpush1.msra.mxu0 0.0
        %1114 = vmatprep.subr.mxu0 0.0
        %1115 = vmatpush1.msra.mxu0 0.0
        %1116 = vmatprep.subr.mxu0 0.0
        %1117 = vmatpush1.msra.mxu0 0.0
        %1118 = vmatprep.subr.mxu0 0.0
        %1119 = vmatpush1.msra.mxu0 0.0
        %1120 = vmatprep.subr.mxu0 0.0
        %1121 = vmatpush1.msra.mxu0 0.0
        %1122 = vmatprep.subr.mxu0 0.0
        %1123 = vmatpush1.msra.mxu0 0.0
        %1124 = vmatprep.subr.mxu0 0.0
        %1125 = vmatpush1.msra.mxu0 0.0
        %1126 = vmatprep.subr.mxu0 0.0
        %1127 = vmatpush1.msra.mxu0 0.0
        %1128 = vmatprep.subr.mxu0 0.0
        %1129 = vmatpush1.msra.mxu0 0.0
        %1130 = vmatprep.subr.mxu0 0.0
        %1131 = vmatpush1.msra.mxu0 0.0
        %1132 = vmatprep.subr.mxu0 0.0
        %1133 = vmatpush1.msra.mxu0 0.0
        %1134 = vmatprep.subr.mxu0 0.0
        %1135 = vmatpush1.msra.mxu0 0.0
        %1136 = vmatprep.subr.mxu0 0.0
        %1137 = vmatpush1.msra.mxu0 0.0
        %1138 = vmatprep.subr.mxu0 0.0
        %1139 = vmatpush1.msra.mxu0 0.0
        %1140 = vmatprep.subr.mxu0 0.0
        %1141 = vmatpush1.msra.mxu0 0.0
        %1142 = vmatprep.subr.mxu0 0.0
        %1143 = vmatpush1.msra.mxu0 0.0
        %1144 = vmatprep.subr.mxu0 0.0
        %1145 = vmatpush1.msra.mxu0 0.0
        %1146 = vmatprep.subr.mxu0 0.0
        %1147 = vmatpush1.msra.mxu0 0.0
        %1148 = vmatprep.subr.mxu0 0.0
        %1149 = vmatpush1.msra.mxu0 0.0
        %1150 = vmatprep.subr.mxu0 0.0
        %1151 = vmatpush1.msra.mxu0 0.0
        %1152 = vmatprep.subr.mxu0 0.0
        %1153 = vmatpush1.msra.mxu0 0.0
        %1154 = vmatprep.subr.mxu0 0.0
        %1155 = vmatpush1.msra.mxu0 0.0
        %1156 = vmatprep.subr.mxu0 0.0
        %1157 = vmatpush1.msra.mxu0 0.0
        %1158 = vmatprep.subr.mxu0 0.0
        %1159 = vmatpush1.msra.mxu0 0.0
        %1160 = vmatprep.subr.mxu0 0.0
        %1161 = vmatpush1.msra.mxu0 0.0
        %1162 = vmatprep.subr.mxu0 0.0
        %1163 = vmatpush1.msra.mxu0 0.0
        %1164 = vmatprep.mubr.f32.mxu0 0.0
        %1165 = vmatmul.mubr.f32.gmra.mrb[0].mxu0 %v1098
        %v1166 = vpop.f32.mrb[0].mxu0
        %v1167 = vadd.f32 %v1095, %v1166
        %v1168 = vpop.f32.mrb[0].mxu0
        %1169 = vdwg.mxu0
        %1170 = vst.msk [vmem:[%s299] sm:$0xff] %vm319, %v1167
        %s1171 = sand.u32 %s146, 1
        %s1172 = scalar_lea.sflag [#allocation4], %s1171
        %s1173 = sand.u32 %s146, 1
        %s1174 = smul.addr %s1173, 8
        %s1175 = scalar_lea.vmem [#allocation8], %s1174
        %s1176 = sand.u32 %s172, 1
        %s1177 = scalar_lea.sflag [#allocation10], %s1176
        %s1178 = sand.u32 %s172, 1
        %s1179 = smul.addr %s1178, 32
        %s1180 = scalar_lea.vmem [#allocation9], %s1179
        // Predicated region
        $region53: #{tpu_custom_call.1} parent=39 // pred_check
          %p1181 = pneg %p156
        $region54: #{tpu_custom_call.1} parent=39 // pred_check_branch
          %1183 = sbr.rel (%p1181) target = $region56
        $region55: #{tpu_custom_call.1} parent=39 // pred_region
          %s1185 = ssub.s32 128, 128
          %1186 = vsyncadd %s1172, %s1185
          %s1187 = smul.addr %s28, 128
          %s1188 = scalar_lea.hbm %s5, %s1187
          %s1190 = sshll.u32 %s1175, 4
          %s1191 = int_to_ptr.vmem [resolvable:$true] %s1190
          %1193 = dma.vmem_to_hbm [thread:$0]  %s1191, 128, %s1188, %s1172
        $region56: #{tpu_custom_call.1} parent=39 // pred_fallthru
          _
        // Predicated region
        $region57: #{tpu_custom_call.1} parent=39 // pred_check
          %p1194 = pneg %p182
        $region58: #{tpu_custom_call.1} parent=39 // pred_check_branch
          %1196 = sbr.rel (%p1194) target = $region60
        $region59: #{tpu_custom_call.1} parent=39 // pred_region
          %s1198 = ssub.s32 512, 512
          %1199 = vsyncadd %s1177, %s1198
          %s1200 = smul.addr %s28, 4
          %s1201 = smul.addr %s1200, 128
          %s1202 = scalar_lea.hbm %s6, %s1201
          %s1203 = sshll.u32 %s1180, 4
          %s1204 = int_to_ptr.vmem [resolvable:$true] %s1203
          %1209 = dma.vmem_to_hbm [thread:$0]  %s1204, 512, %s1202, %s1177, 128, 128, 8
        $region60: #{tpu_custom_call.1} parent=39 // pred_fallthru
          _
      $region40: #{tpu_custom_call.1} parent=5 // pred_fallthru
        _
      %p1210 = scmp.le.s32.totalorder 2, %s23
      // Predicated region
      $region61: #{tpu_custom_call.1} parent=5 // pred_check
        %p1211 = pneg %p1210
      $region62: #{tpu_custom_call.1} parent=5 // pred_check_branch
        %1213 = sbr.rel (%p1211) target = $region64
      $region63: #{tpu_custom_call.1} parent=5 // pred_region
        %s1214 = ssub.s32 %s23, 2
        // Predicated region
        $region65: #{tpu_custom_call.1} parent=63 // pred_check
          %p1215 = pneg %p162
        $region66: #{tpu_custom_call.1} parent=63 // pred_check_branch
          %1217 = sbr.rel (%p1215) target = $region68
        $region67: #{tpu_custom_call.1} parent=63 // pred_region
          %s1218 = sand.u32 %s147, 1
          %s1219 = scalar_lea.sflag [#allocation4], %s1218
          %s1220 = sand.u32 %s147, 1
          %s1221 = smul.addr %s1220, 8
          %s1222 = scalar_lea.vmem [#allocation8], %s1221
          %1223 = dma.done %s1219, 128
        $region68: #{tpu_custom_call.1} parent=63 // pred_fallthru
          _
        // Predicated region
        $region69: #{tpu_custom_call.1} parent=63 // pred_check
          %p1224 = pneg %p188
        $region70: #{tpu_custom_call.1} parent=63 // pred_check_branch
          %1226 = sbr.rel (%p1224) target = $region72
        $region71: #{tpu_custom_call.1} parent=63 // pred_region
          %s1227 = sand.u32 %s173, 1
          %s1228 = scalar_lea.sflag [#allocation10], %s1227
          %s1229 = sand.u32 %s173, 1
          %s1230 = smul.addr %s1229, 32
          %s1231 = scalar_lea.vmem [#allocation9], %s1230
          %1232 = dma.done %s1228, 512
        $region72: #{tpu_custom_call.1} parent=63 // pred_fallthru
          _
      $region64: #{tpu_custom_call.1} parent=5 // pred_fallthru
        _
    $region6: #{tpu_custom_call.1} parent=1 // loop_footer
      %s27 = sadd.s32 1, %s23
    $region7: #{tpu_custom_call.1} parent=1 // loop_footer_branch
      %22 = sbr.rel target = $region3
    $region8: #{tpu_custom_call.1} parent=1 // loop_exit
      _
    %1233 = vsyncpa [#allocation3], 1
    %s1234 = scalar_lea.sflag [#allocation3], 1
    %1235 = vsyncpa %s1234, 1
    %1236 = vsyncpa [#allocation6], 1
    %1237 = vsyncpa [#allocation4], 1
    %s1238 = scalar_lea.sflag [#allocation4], 1
    %1239 = vsyncpa %s1238, 1
    %1240 = vsyncpa [#allocation10], 1
    %s1241 = scalar_lea.sflag [#allocation10], 1
    %1242 = vsyncpa %s1241, 1

</llo_original>
